<compile_context>
chip_gen: v7x
topology: tpu7x:2x2x1
jax: 0.10.0
libtpu: 0.0.40
codegen_flags: <defaults>
</compile_context>

<pallas_src>
import functools
import math

import jax
import jax.numpy as jnp
import numpy as np
from jax import lax
from jax.experimental import pallas as pl
from jax.experimental.pallas import tpu as pltpu


def _round_up(x, m):
    return (x + m - 1) // m * m


def _deconv_bn_relu_kernel(x_ref, w_ref, g_ref, b_ref, out_ref, *scratch,
                           cin_p, cout_p, w_cols, hw, tile_m, m_valid,
                           inv_count, eps, cache_y):
    """Fused deconv + BN(batch stats) + ReLU.

    grid = (2, n_tiles): axis 0 is the pass (0: matmul+stats, 1: normalize),
    axis 1 is the column tile over the flattened (n, i, j) dimension.

    x_ref : (cin_p, tile_m)          bf16  channel-major flattened input tile
    w_ref : (4*cout_p, 4*cin_p)      f32   phase-major transposed weight
    g_ref/b_ref : (cout_p, 1)        f32   BN gamma / beta
    out_ref : (4*cout_p, tile_m)     bf16  relu-normalized y^T tile (lane-dense)
    scratch: [y_buf (bf16, only if cache_y)], sum, ssq, scale, shift (f32)
    """
    if cache_y:
        y_buf, sum_acc, ssq_acc, scale_sc, shift_sc = scratch
    else:
        sum_acc, ssq_acc, scale_sc, shift_sc = scratch

    p = pl.program_id(0)          # pass
    t = pl.program_id(1)          # column tile

    def compute_y():
        # Column index within the tile.  tile_m is a multiple of hw, so the
        # local index is congruent to the global (n, i, j) index mod W and hw.
        col = lax.broadcasted_iota(jnp.int32, (cin_p, tile_m), 1)
        j_ok = (col % w_cols) != (w_cols - 1)       # not last column of a row
        i_ok = (col % hw) < (hw - w_cols)           # not last row of an image

        x0 = x_ref[...].astype(jnp.float32)
        zero = jnp.zeros_like(x0)
        # shifted[m] = x[m + delta]  (circular wrap lands only on masked cols)
        x01 = jnp.where(j_ok, pltpu.roll(x0, tile_m - 1, 1), zero)
        x10 = jnp.where(i_ok, pltpu.roll(x0, tile_m - w_cols, 1), zero)
        x11 = jnp.where(i_ok & j_ok,
                        pltpu.roll(x0, tile_m - w_cols - 1, 1), zero)

        # TODO(synk): for large Cin/Cout add K / output-row tiling of this
        # matmul (extra grid axis) instead of one monolithic dot per shift.
        w = w_ref[...]
        y = jnp.dot(w[:, 0 * cin_p:1 * cin_p], x0,
                    preferred_element_type=jnp.float32)
        y += jnp.dot(w[:, 1 * cin_p:2 * cin_p], x01,
                     preferred_element_type=jnp.float32)
        y += jnp.dot(w[:, 2 * cin_p:3 * cin_p], x10,
                     preferred_element_type=jnp.float32)
        y += jnp.dot(w[:, 3 * cin_p:4 * cin_p], x11,
                     preferred_element_type=jnp.float32)
        return y                                     # (4*cout_p, tile_m) f32

    @pl.when(p == 0)
    def _matmul_and_stats():
        @pl.when(t == 0)
        def _init():
            sum_acc[...] = jnp.zeros_like(sum_acc)
            ssq_acc[...] = jnp.zeros_like(ssq_acc)

        y = compute_y()
        if cache_y:
            y_buf[t] = y.astype(jnp.bfloat16)
        # Mask padded columns out of the batch statistics.
        colv = lax.broadcasted_iota(jnp.int32, (4 * cout_p, tile_m), 1)
        valid = (t * tile_m + colv) < m_valid
        yv = jnp.where(valid, y, 0.0)
        sum_acc[...] += jnp.sum(yv, axis=1, keepdims=True)
        ssq_acc[...] += jnp.sum(yv * yv, axis=1, keepdims=True)

    @pl.when(p == 1)
    def _bn_relu():
        @pl.when(t == 0)
        def _finalize_stats():
            # Pool the 4 sub-pixel phases of each output channel (rows of y^T
            # are (a, b, co)-ordered).  cout_p is a multiple of 8, so all
            # slices below are sublane-aligned.
            s = (sum_acc[0 * cout_p:1 * cout_p] + sum_acc[1 * cout_p:2 * cout_p]
                 + sum_acc[2 * cout_p:3 * cout_p] + sum_acc[3 * cout_p:4 * cout_p])
            q = (ssq_acc[0 * cout_p:1 * cout_p] + ssq_acc[1 * cout_p:2 * cout_p]
                 + ssq_acc[2 * cout_p:3 * cout_p] + ssq_acc[3 * cout_p:4 * cout_p])
            mean = s * inv_count
            # E[y^2]-E[y]^2 in f32; benign here (bias-free y has small mean).
            var = jnp.maximum(q * inv_count - mean * mean, 0.0)
            sc = g_ref[...] * lax.rsqrt(var + eps)
            sh = b_ref[...] - mean * sc
            for k in range(4):                      # replicate per phase
                scale_sc[k * cout_p:(k + 1) * cout_p, :] = sc
                shift_sc[k * cout_p:(k + 1) * cout_p, :] = sh

        if cache_y:
            y = y_buf[t].astype(jnp.float32)
        else:
            y = compute_y()                          # recompute: VMEM-bounded
        out_ref[...] = jnp.maximum(
            y * scale_sc[...] + shift_sc[...], 0.0).astype(out_ref.dtype)


def deconv_bn_act(x_nchw, weight, bias, gamma, beta, eps=1e-5,
                  target_tile_m=1024):
    """Forward of DeConvBNAct with default args (scale_factor=2, relu)."""
    # `bias` is intentionally unused: a constant per-channel bias cancels
    # exactly in training-mode BatchNorm.
    # TODO(synk): eval-mode BN (running stats) would require folding the bias
    # into the shift instead.
    del bias
    N, Cin, H, W = x_nchw.shape
    Cout = weight.shape[1]
    hw = H * W
    m_real = N * hw

    cin_p = _round_up(Cin, 8)
    cout_p = _round_up(Cout, 8)

    # tile_m must be a whole number of images (so in-kernel shifts never need a
    # neighbor tile) and a multiple of 128 lanes.
    step = 128 // math.gcd(hw, 128)            # images per 128-lane alignment
    want = max(1, target_tile_m // hw)
    imgs_per_tile = min(_round_up(N, step), max(step, (want // step) * step))
    tile_m = imgs_per_tile * hw
    n_tiles = -(-N // imgs_per_tile)
    n_pad = n_tiles * imgs_per_tile
    m_pad = n_tiles * tile_m

    # ---- channel-major flattened input (one fused transpose+pad+cast) ----
    x_flat = x_nchw.transpose(1, 0, 2, 3).reshape(Cin, m_real)
    x_flat = jnp.pad(x_flat, ((0, cin_p - Cin), (0, m_pad - m_real)))
    x_flat = x_flat.astype(jnp.bfloat16)

    # ---- phase-major transposed weight: rows (a, b, co), cols (shift s, ci).
    #      Kernel tap: kh = a + 1 - 2*di, kw = b + 1 - 2*dj.
    wt = jnp.zeros((4 * cout_p, 4 * cin_p), jnp.float32)
    for a in range(2):
        for b in range(2):
            for di in range(2):
                for dj in range(2):
                    kh = a + 1 - 2 * di
                    kw = b + 1 - 2 * dj
                    if 0 <= kh < 3 and 0 <= kw < 3:
                        r0 = (2 * a + b) * cout_p
                        c0 = (2 * di + dj) * cin_p
                        wt = wt.at[r0:r0 + Cout, c0:c0 + Cin].set(
                            weight[:, :, kh, kw].T.astype(jnp.float32))

    g2 = jnp.pad(gamma.astype(jnp.float32), (0, cout_p - Cout),
                 constant_values=1.0).reshape(cout_p, 1)
    b2 = jnp.pad(beta.astype(jnp.float32),
                 (0, cout_p - Cout)).reshape(cout_p, 1)

    # ---- VMEM budget: cache the bf16 y^T slab when it fits, else recompute.
    slab_bytes = n_tiles * 4 * cout_p * tile_m * 2
    buf_bytes = (2 * cin_p * tile_m * 2            # double-buffered x tiles
                 + 2 * 4 * cout_p * tile_m * 2     # double-buffered out tiles
                 + 2 * 4 * cout_p * 4 * cin_p * 4  # weight
                 + 4 * 4 * cout_p * 4              # stats scratch
                 + 4 * cout_p * tile_m * 4)        # live f32 y tile
    cache_y = (slab_bytes + buf_bytes) <= 40 * 2**20   # safe under v7x 64 MiB
    vmem_limit = int(min(100 * 2**20,
                         (slab_bytes if cache_y else 0) + buf_bytes + 16 * 2**20))

    kernel = functools.partial(
        _deconv_bn_relu_kernel,
        cin_p=cin_p, cout_p=cout_p, w_cols=W, hw=hw, tile_m=tile_m,
        m_valid=m_real, inv_count=1.0 / float(4 * m_real), eps=float(eps),
        cache_y=cache_y)

    if cache_y:
        x_index_map = lambda p, t: (0, t * (1 - p))   # x only read in pass 0
    else:
        x_index_map = lambda p, t: (0, t)             # recompute: stream twice

    scratch = []
    if cache_y:
        scratch.append(pltpu.VMEM((n_tiles, 4 * cout_p, tile_m), jnp.bfloat16))
    scratch += [pltpu.VMEM((4 * cout_p, 1), jnp.float32) for _ in range(4)]

    # TODO(synk): both grid axes are "arbitrary" because the BN batch-stat
    # barrier between pass 0 and pass 1 is global; a v7x dual-TensorCore split
    # would need core_map + CMEM stat pooling.
    yT = pl.pallas_call(
        kernel,
        out_shape=jax.ShapeDtypeStruct((4 * cout_p, m_pad), jnp.bfloat16),
        grid_spec=pltpu.PrefetchScalarGridSpec(
            num_scalar_prefetch=0,
            grid=(2, n_tiles),                         # (pass, column tile)
            in_specs=[
                pl.BlockSpec((cin_p, tile_m), x_index_map),
                pl.BlockSpec((4 * cout_p, 4 * cin_p), lambda p, t: (0, 0)),
                pl.BlockSpec((cout_p, 1), lambda p, t: (0, 0)),
                pl.BlockSpec((cout_p, 1), lambda p, t: (0, 0)),
            ],
            # output blocks are only written in pass 1; park on block 0 in pass 0
            out_specs=pl.BlockSpec((4 * cout_p, tile_m), lambda p, t: (0, t * p)),
            scratch_shapes=scratch,
        ),
        compiler_params=pltpu.CompilerParams(
            dimension_semantics=("arbitrary", "arbitrary"),
            vmem_limit_bytes=vmem_limit),
    )(x_flat, wt, g2, b2)

    # TODO(synk): USBatchNorm2d running-stat updates (a training side effect)
    # are not materialized; they do not affect the forward output.

    # Un-interleave sub-pixel phases and drop channel/batch padding, in bf16
    # (single fused XLA slice+transpose pass).
    out = yT.reshape(2, 2, cout_p, n_pad, H, W)[:, :, :Cout, :N]
    out = out.transpose(3, 2, 4, 0, 5, 1)          # (n, c, i, a, j, b)
    return out.reshape(N, Cout, 2 * H, 2 * W)      # bf16


if __name__ == "__main__":
    key = jax.random.PRNGKey(0)
    kx, kw, kb, kg, kbt = jax.random.split(key, 5)

    N, Cin, H, W = 2, 4, 16, 16
    Cout = 8

    x = jax.random.normal(kx, (N, Cin, H, W), jnp.float32)
    # ConvTranspose2d weight shape: (in_channels, out_channels, kH, kW)
    weight = 0.1 * jax.random.normal(kw, (Cin, Cout, 3, 3), jnp.float32)
    bias = 0.1 * jax.random.normal(kb, (Cout,), jnp.float32)
    gamma = 1.0 + 0.1 * jax.random.normal(kg, (Cout,), jnp.float32)
    beta = 0.1 * jax.random.normal(kbt, (Cout,), jnp.float32)

    out = jax.jit(deconv_bn_act)(x, weight, bias, gamma, beta)
    out = jax.block_until_ready(out)

    # Pure-XLA reference: ConvTranspose2d == lhs-dilated conv with flipped
    # kernel.  x is quantized to bf16 like the kernel's HBM input; bias IS
    # included here to verify it cancels under training-mode BatchNorm.
    xq = x.astype(jnp.bfloat16).astype(jnp.float32)
    w_flip = jnp.transpose(weight, (1, 0, 2, 3))[:, :, ::-1, ::-1]
    y_conv = lax.conv_general_dilated(
        xq, w_flip, window_strides=(1, 1), padding=((1, 2), (1, 2)),
        lhs_dilation=(2, 2), dimension_numbers=("NCHW", "OIHW", "NCHW"),
    ) + bias[None, :, None, None]
    m = y_conv.mean((0, 2, 3), keepdims=True)
    v = ((y_conv - m) ** 2).mean((0, 2, 3), keepdims=True)
    ref = jnp.maximum(
        (y_conv - m) / jnp.sqrt(v + 1e-5) * gamma[None, :, None, None]
        + beta[None, :, None, None], 0.0)

    np.testing.assert_allclose(np.asarray(out.astype(jnp.float32)),
                               np.asarray(ref), rtol=2e-2, atol=2e-2)
    print("KERNEL_OK")
</pallas_src>

<mosaic_0001>
module attributes {stable_mosaic.version = 11 : i64} {
  func.func @_deconv_bn_relu_kernel(%arg0: i32, %arg1: i32, %arg2: memref<8x512xbf16, #tpu.memory_space<vmem>>, %arg3: memref<32x32xf32, #tpu.memory_space<vmem>>, %arg4: memref<8x1xf32, #tpu.memory_space<vmem>>, %arg5: memref<8x1xf32, #tpu.memory_space<vmem>>, %arg6: memref<32x512xbf16, #tpu.memory_space<vmem>>, %arg7: memref<1x32x512xbf16, #tpu.memory_space<vmem>>, %arg8: memref<32x1xf32, #tpu.memory_space<vmem>>, %arg9: memref<32x1xf32, #tpu.memory_space<vmem>>, %arg10: memref<32x1xf32, #tpu.memory_space<vmem>>, %arg11: memref<32x1xf32, #tpu.memory_space<vmem>>) attributes {dimension_semantics = [#tpu.dimension_semantics<arbitrary>, #tpu.dimension_semantics<arbitrary>], iteration_bounds = array<i64: 2, 1>, scalar_prefetch = 0 : i64, scratch_operands = 5 : i64, tpu.core_type = #tpu.core_type<tc>, window_params = [{transform_indices = @transform_0, window_bounds = array<i64: 8, 512>}, {pipeline_mode = #tpu.pipeline_mode<synchronous>, transform_indices = @transform_1, window_bounds = array<i64: 32, 32>}, {pipeline_mode = #tpu.pipeline_mode<synchronous>, transform_indices = @transform_2, window_bounds = array<i64: 8, 1>}, {pipeline_mode = #tpu.pipeline_mode<synchronous>, transform_indices = @transform_3, window_bounds = array<i64: 8, 1>}, {transform_indices = @transform_4, window_bounds = array<i64: 32, 512>}]} {
    %c0_i32 = arith.constant 0 : i32
    %0 = arith.cmpi eq, %arg0, %c0_i32 : i32
    %1 = arith.extui %0 : i1 to i32
    %c0_i32_0 = arith.constant 0 : i32
    %2 = arith.cmpi ne, %1, %c0_i32_0 : i32
    scf.if %2 {
      %c0_i32_2 = arith.constant 0 : i32
      %6 = arith.cmpi eq, %arg1, %c0_i32_2 : i32
      %7 = arith.extui %6 : i1 to i32
      %c0_i32_3 = arith.constant 0 : i32
      %8 = arith.cmpi ne, %7, %c0_i32_3 : i32
      scf.if %8 {
        %cst_35 = arith.constant 0.000000e+00 : f32
        %92 = vector.broadcast %cst_35 : f32 to vector<32x1xf32>
        %c0_36 = arith.constant 0 : index
        %c0_37 = arith.constant 0 : index
        %93 = vector.load %arg8[%c0_36, %c0_37] : memref<32x1xf32, #tpu.memory_space<vmem>>, vector<32x1xf32>
        tpu.vector_store %arg8[%c0_36, %c0_37], %92 {strides = array<i32>} : memref<32x1xf32, #tpu.memory_space<vmem>>, vector<32x1xf32>,
        %cst_38 = arith.constant 0.000000e+00 : f32
        %94 = vector.broadcast %cst_38 : f32 to vector<32x1xf32>
        %c0_39 = arith.constant 0 : index
        %c0_40 = arith.constant 0 : index
        %95 = vector.load %arg9[%c0_39, %c0_40] : memref<32x1xf32, #tpu.memory_space<vmem>>, vector<32x1xf32>
        tpu.vector_store %arg9[%c0_39, %c0_40], %94 {strides = array<i32>} : memref<32x1xf32, #tpu.memory_space<vmem>>, vector<32x1xf32>,
      } else {
      }
      %9 = tpu.iota {dimensions = array<i32: 1>} : vector<8x512xi32>
      %c16_i32 = arith.constant 16 : i32
      %c0_i32_4 = arith.constant 0 : i32
      %10 = arith.cmpi eq, %c16_i32, %c0_i32_4 : i32
      %c1_i32_5 = arith.constant 1 : i32
      %11 = arith.select %10, %c1_i32_5, %c16_i32 : i32
      %12 = vector.broadcast %11 : i32 to vector<8x512xi32>
      %13 = arith.remsi %9, %12 : vector<8x512xi32>
      %c0_i32_6 = arith.constant 0 : i32
      %14 = vector.broadcast %c0_i32_6 : i32 to vector<8x512xi32>
      %15 = arith.cmpi ne, %13, %14 : vector<8x512xi32>
      %c0_i32_7 = arith.constant 0 : i32
      %16 = vector.broadcast %c0_i32_7 : i32 to vector<8x512xi32>
      %17 = arith.cmpi slt, %13, %16 : vector<8x512xi32>
      %c0_i32_8 = arith.constant 0 : i32
      %18 = arith.cmpi slt, %11, %c0_i32_8 : i32
      %19 = vector.broadcast %18 : i1 to vector<8x512xi1>
      %20 = vector.broadcast %19 : vector<8x512xi1> to vector<8x512xi1>
      %21 = arith.xori %17, %20 : vector<8x512xi1>
      %22 = arith.andi %21, %15 : vector<8x512xi1>
      %23 = vector.broadcast %11 : i32 to vector<8x512xi32>
      %24 = arith.addi %13, %23 : vector<8x512xi32>
      %25 = arith.select %22, %24, %13 : vector<8x512xi1>, vector<8x512xi32>
      %c15_i32 = arith.constant 15 : i32
      %26 = vector.broadcast %c15_i32 : i32 to vector<8x512xi32>
      %27 = arith.cmpi ne, %25, %26 : vector<8x512xi32>
      %c256_i32 = arith.constant 256 : i32
      %c0_i32_9 = arith.constant 0 : i32
      %28 = arith.cmpi eq, %c256_i32, %c0_i32_9 : i32
      %c1_i32_10 = arith.constant 1 : i32
      %29 = arith.select %28, %c1_i32_10, %c256_i32 : i32
      %30 = vector.broadcast %29 : i32 to vector<8x512xi32>
      %31 = arith.remsi %9, %30 : vector<8x512xi32>
      %c0_i32_11 = arith.constant 0 : i32
      %32 = vector.broadcast %c0_i32_11 : i32 to vector<8x512xi32>
      %33 = arith.cmpi ne, %31, %32 : vector<8x512xi32>
      %c0_i32_12 = arith.constant 0 : i32
      %34 = vector.broadcast %c0_i32_12 : i32 to vector<8x512xi32>
      %35 = arith.cmpi slt, %31, %34 : vector<8x512xi32>
      %c0_i32_13 = arith.constant 0 : i32
      %36 = arith.cmpi slt, %29, %c0_i32_13 : i32
      %37 = vector.broadcast %36 : i1 to vector<8x512xi1>
      %38 = vector.broadcast %37 : vector<8x512xi1> to vector<8x512xi1>
      %39 = arith.xori %35, %38 : vector<8x512xi1>
      %40 = arith.andi %39, %33 : vector<8x512xi1>
      %41 = vector.broadcast %29 : i32 to vector<8x512xi32>
      %42 = arith.addi %31, %41 : vector<8x512xi32>
      %43 = arith.select %40, %42, %31 : vector<8x512xi1>, vector<8x512xi32>
      %c240_i32 = arith.constant 240 : i32
      %44 = vector.broadcast %c240_i32 : i32 to vector<8x512xi32>
      %45 = arith.cmpi slt, %43, %44 : vector<8x512xi32>
      %c0 = arith.constant 0 : index
      %c0_14 = arith.constant 0 : index
      %46 = vector.load %arg2[%c0, %c0_14] : memref<8x512xbf16, #tpu.memory_space<vmem>>, vector<8x512xbf16>
      %47 = arith.extf %46 : vector<8x512xbf16> to vector<8x512xf32>
      %cst = arith.constant 0.000000e+00 : f32
      %48 = vector.broadcast %cst : f32 to vector<8x512xf32>
      %c511_i32 = arith.constant 511 : i32
      %49 = tpu.dynamic_rotate %47 by %c511_i32 dim 1 : vector<8x512xf32>, i32 -> vector<8x512xf32>
      %50 = arith.select %27, %49, %48 : vector<8x512xi1>, vector<8x512xf32>
      %c496_i32 = arith.constant 496 : i32
      %51 = tpu.dynamic_rotate %47 by %c496_i32 dim 1 : vector<8x512xf32>, i32 -> vector<8x512xf32>
      %52 = arith.select %45, %51, %48 : vector<8x512xi1>, vector<8x512xf32>
      %53 = arith.andi %45, %27 : vector<8x512xi1>
      %c495_i32 = arith.constant 495 : i32
      %54 = tpu.dynamic_rotate %47 by %c495_i32 dim 1 : vector<8x512xf32>, i32 -> vector<8x512xf32>
      %55 = arith.select %53, %54, %48 : vector<8x512xi1>, vector<8x512xf32>
      %c0_15 = arith.constant 0 : index
      %c0_16 = arith.constant 0 : index
      %56 = vector.load %arg3[%c0_15, %c0_16] : memref<32x32xf32, #tpu.memory_space<vmem>>, vector<32x32xf32>
      %57 = vector.extract_strided_slice %56 {offsets = [0, 0], sizes = [32, 8], strides = [1, 1]} : vector<32x32xf32> to vector<32x8xf32>
      %cst_17 = arith.constant dense<0.000000e+00> : vector<32x512xf32>
      %58 = tpu.matmul %57, %47, %cst_17 {dimension_numbers = #tpu.dot_dimension_numbers<[1], [0], [0], [1], [0, 0, 1, 1], [], []>} : vector<32x8xf32>, vector<8x512xf32>, vector<32x512xf32> -> vector<32x512xf32>
      %59 = vector.extract_strided_slice %56 {offsets = [0, 8], sizes = [32, 8], strides = [1, 1]} : vector<32x32xf32> to vector<32x8xf32>
      %cst_18 = arith.constant dense<0.000000e+00> : vector<32x512xf32>
      %60 = tpu.matmul %59, %50, %cst_18 {dimension_numbers = #tpu.dot_dimension_numbers<[1], [0], [0], [1], [0, 0, 1, 1], [], []>} : vector<32x8xf32>, vector<8x512xf32>, vector<32x512xf32> -> vector<32x512xf32>
      %61 = arith.addf %58, %60 : vector<32x512xf32>
      %62 = vector.extract_strided_slice %56 {offsets = [0, 16], sizes = [32, 8], strides = [1, 1]} : vector<32x32xf32> to vector<32x8xf32>
      %cst_19 = arith.constant dense<0.000000e+00> : vector<32x512xf32>
      %63 = tpu.matmul %62, %52, %cst_19 {dimension_numbers = #tpu.dot_dimension_numbers<[1], [0], [0], [1], [0, 0, 1, 1], [], []>} : vector<32x8xf32>, vector<8x512xf32>, vector<32x512xf32> -> vector<32x512xf32>
      %64 = arith.addf %61, %63 : vector<32x512xf32>
      %65 = vector.extract_strided_slice %56 {offsets = [0, 24], sizes = [32, 8], strides = [1, 1]} : vector<32x32xf32> to vector<32x8xf32>
      %cst_20 = arith.constant dense<0.000000e+00> : vector<32x512xf32>
      %66 = tpu.matmul %65, %55, %cst_20 {dimension_numbers = #tpu.dot_dimension_numbers<[1], [0], [0], [1], [0, 0, 1, 1], [], []>} : vector<32x8xf32>, vector<8x512xf32>, vector<32x512xf32> -> vector<32x512xf32>
      %67 = arith.addf %64, %66 : vector<32x512xf32>
      %68 = arith.truncf %67 : vector<32x512xf32> to vector<32x512xbf16>
      %69 = arith.index_cast %arg1 : i32 to index
      %c0_21 = arith.constant 0 : index
      %c0_22 = arith.constant 0 : index
      %70 = vector.load %arg7[%69, %c0_21, %c0_22] : memref<1x32x512xbf16, #tpu.memory_space<vmem>>, vector<1x32x512xbf16>
      %71 = vector.shape_cast %70 : vector<1x32x512xbf16> to vector<32x512xbf16>
      %72 = vector.shape_cast %68 : vector<32x512xbf16> to vector<1x32x512xbf16>
      tpu.vector_store %arg7[%69, %c0_21, %c0_22], %72 {strides = array<i32>} : memref<1x32x512xbf16, #tpu.memory_space<vmem>>, vector<1x32x512xbf16>,
      %73 = tpu.iota {dimensions = array<i32: 1>} : vector<32x512xi32>
      %c512_i32 = arith.constant 512 : i32
      %74 = arith.muli %arg1, %c512_i32 : i32
      %75 = vector.broadcast %74 : i32 to vector<32x512xi32>
      %76 = arith.addi %75, %73 : vector<32x512xi32>
      %c512_i32_23 = arith.constant 512 : i32
      %77 = vector.broadcast %c512_i32_23 : i32 to vector<32x512xi32>
      %78 = arith.cmpi slt, %76, %77 : vector<32x512xi32>
      %cst_24 = arith.constant 0.000000e+00 : f32
      %79 = vector.broadcast %cst_24 : f32 to vector<32x512xf32>
      %80 = arith.select %78, %67, %79 : vector<32x512xi1>, vector<32x512xf32>
      %c0_25 = arith.constant 0 : index
      %c0_26 = arith.constant 0 : index
      %81 = vector.load %arg8[%c0_25, %c0_26] : memref<32x1xf32, #tpu.memory_space<vmem>>, vector<32x1xf32>
      %cst_27 = arith.constant dense<0.000000e+00> : vector<32xf32>
      %82 = vector.multi_reduction <add>, %80, %cst_27 [1] : vector<32x512xf32> to vector<32xf32>
      %83 = vector.shape_cast %82 : vector<32xf32> to vector<32x1xf32>
      %84 = arith.addf %81, %83 : vector<32x1xf32>
      %c0_28 = arith.constant 0 : index
      %c0_29 = arith.constant 0 : index
      %85 = vector.load %arg8[%c0_28, %c0_29] : memref<32x1xf32, #tpu.memory_space<vmem>>, vector<32x1xf32>
      tpu.vector_store %arg8[%c0_28, %c0_29], %84 {strides = array<i32>} : memref<32x1xf32, #tpu.memory_space<vmem>>, vector<32x1xf32>,
      %c0_30 = arith.constant 0 : index
      %c0_31 = arith.constant 0 : index
      %86 = vector.load %arg9[%c0_30, %c0_31] : memref<32x1xf32, #tpu.memory_space<vmem>>, vector<32x1xf32>
      %87 = arith.mulf %80, %80 : vector<32x512xf32>
      %cst_32 = arith.constant dense<0.000000e+00> : vector<32xf32>
      %88 = vector.multi_reduction <add>, %87, %cst_32 [1] : vector<32x512xf32> to vector<32xf32>
      %89 = vector.shape_cast %88 : vector<32xf32> to vector<32x1xf32>
      %90 = arith.addf %86, %89 : vector<32x1xf32>
      %c0_33 = arith.constant 0 : index
      %c0_34 = arith.constant 0 : index
      %91 = vector.load %arg9[%c0_33, %c0_34] : memref<32x1xf32, #tpu.memory_space<vmem>>, vector<32x1xf32>
      tpu.vector_store %arg9[%c0_33, %c0_34], %90 {strides = array<i32>} : memref<32x1xf32, #tpu.memory_space<vmem>>, vector<32x1xf32>,
    } else {
    }
    %c1_i32 = arith.constant 1 : i32
    %3 = arith.cmpi eq, %arg0, %c1_i32 : i32
    %4 = arith.extui %3 : i1 to i32
    %c0_i32_1 = arith.constant 0 : i32
    %5 = arith.cmpi ne, %4, %c0_i32_1 : i32
    scf.if %5 {
      %c0_i32_2 = arith.constant 0 : i32
      %6 = arith.cmpi eq, %arg1, %c0_i32_2 : i32
      %7 = arith.extui %6 : i1 to i32
      %c0_i32_3 = arith.constant 0 : i32
      %8 = arith.cmpi ne, %7, %c0_i32_3 : i32
      scf.if %8 {
        %c0_11 = arith.constant 0 : index
        %c0_12 = arith.constant 0 : index
        %23 = vector.load %arg8[%c0_11, %c0_12] : memref<32x1xf32, #tpu.memory_space<vmem>>, vector<8x1xf32>
        %c8 = arith.constant 8 : index
        %c0_13 = arith.constant 0 : index
        %24 = vector.load %arg8[%c8, %c0_13] : memref<32x1xf32, #tpu.memory_space<vmem>>, vector<8x1xf32>
        %25 = arith.addf %23, %24 : vector<8x1xf32>
        %c16 = arith.constant 16 : index
        %c0_14 = arith.constant 0 : index
        %26 = vector.load %arg8[%c16, %c0_14] : memref<32x1xf32, #tpu.memory_space<vmem>>, vector<8x1xf32>
        %27 = arith.addf %25, %26 : vector<8x1xf32>
        %c24 = arith.constant 24 : index
        %c0_15 = arith.constant 0 : index
        %28 = vector.load %arg8[%c24, %c0_15] : memref<32x1xf32, #tpu.memory_space<vmem>>, vector<8x1xf32>
        %29 = arith.addf %27, %28 : vector<8x1xf32>
        %c0_16 = arith.constant 0 : index
        %c0_17 = arith.constant 0 : index
        %30 = vector.load %arg9[%c0_16, %c0_17] : memref<32x1xf32, #tpu.memory_space<vmem>>, vector<8x1xf32>
        %c8_18 = arith.constant 8 : index
        %c0_19 = arith.constant 0 : index
        %31 = vector.load %arg9[%c8_18, %c0_19] : memref<32x1xf32, #tpu.memory_space<vmem>>, vector<8x1xf32>
        %32 = arith.addf %30, %31 : vector<8x1xf32>
        %c16_20 = arith.constant 16 : index
        %c0_21 = arith.constant 0 : index
        %33 = vector.load %arg9[%c16_20, %c0_21] : memref<32x1xf32, #tpu.memory_space<vmem>>, vector<8x1xf32>
        %34 = arith.addf %32, %33 : vector<8x1xf32>
        %c24_22 = arith.constant 24 : index
        %c0_23 = arith.constant 0 : index
        %35 = vector.load %arg9[%c24_22, %c0_23] : memref<32x1xf32, #tpu.memory_space<vmem>>, vector<8x1xf32>
        %36 = arith.addf %34, %35 : vector<8x1xf32>
        %cst_24 = arith.constant 4.8828125E-4 : f32
        %37 = vector.broadcast %cst_24 : f32 to vector<8x1xf32>
        %38 = arith.mulf %29, %37 : vector<8x1xf32>
        %cst_25 = arith.constant 4.8828125E-4 : f32
        %39 = vector.broadcast %cst_25 : f32 to vector<8x1xf32>
        %40 = arith.mulf %36, %39 : vector<8x1xf32>
        %41 = arith.mulf %38, %38 : vector<8x1xf32>
        %42 = arith.subf %40, %41 : vector<8x1xf32>
        %cst_26 = arith.constant 0.000000e+00 : f32
        %43 = vector.broadcast %cst_26 : f32 to vector<8x1xf32>
        %44 = arith.maximumf %42, %43 : vector<8x1xf32>
        %c0_27 = arith.constant 0 : index
        %c0_28 = arith.constant 0 : index
        %45 = vector.load %arg4[%c0_27, %c0_28] : memref<8x1xf32, #tpu.memory_space<vmem>>, vector<8x1xf32>
        %cst_29 = arith.constant 9.99999974E-6 : f32
        %46 = vector.broadcast %cst_29 : f32 to vector<8x1xf32>
        %47 = arith.addf %44, %46 : vector<8x1xf32>
        %48 = math.rsqrt %47 : vector<8x1xf32>
        %49 = arith.mulf %45, %48 : vector<8x1xf32>
        %c0_30 = arith.constant 0 : index
        %c0_31 = arith.constant 0 : index
        %50 = vector.load %arg5[%c0_30, %c0_31] : memref<8x1xf32, #tpu.memory_space<vmem>>, vector<8x1xf32>
        %51 = arith.mulf %38, %49 : vector<8x1xf32>
        %52 = arith.subf %50, %51 : vector<8x1xf32>
        %c0_32 = arith.constant 0 : index
        %c0_33 = arith.constant 0 : index
        %53 = vector.load %arg10[%c0_32, %c0_33] : memref<32x1xf32, #tpu.memory_space<vmem>>, vector<8x1xf32>
        tpu.vector_store %arg10[%c0_32, %c0_33], %49 {strides = array<i32>} : memref<32x1xf32, #tpu.memory_space<vmem>>, vector<8x1xf32>,
        %c0_34 = arith.constant 0 : index
        %c0_35 = arith.constant 0 : index
        %54 = vector.load %arg11[%c0_34, %c0_35] : memref<32x1xf32, #tpu.memory_space<vmem>>, vector<8x1xf32>
        tpu.vector_store %arg11[%c0_34, %c0_35], %52 {strides = array<i32>} : memref<32x1xf32, #tpu.memory_space<vmem>>, vector<8x1xf32>,
        %c8_36 = arith.constant 8 : index
        %c0_37 = arith.constant 0 : index
        %55 = vector.load %arg10[%c8_36, %c0_37] : memref<32x1xf32, #tpu.memory_space<vmem>>, vector<8x1xf32>
        tpu.vector_store %arg10[%c8_36, %c0_37], %49 {strides = array<i32>} : memref<32x1xf32, #tpu.memory_space<vmem>>, vector<8x1xf32>,
        %c8_38 = arith.constant 8 : index
        %c0_39 = arith.constant 0 : index
        %56 = vector.load %arg11[%c8_38, %c0_39] : memref<32x1xf32, #tpu.memory_space<vmem>>, vector<8x1xf32>
        tpu.vector_store %arg11[%c8_38, %c0_39], %52 {strides = array<i32>} : memref<32x1xf32, #tpu.memory_space<vmem>>, vector<8x1xf32>,
        %c16_40 = arith.constant 16 : index
        %c0_41 = arith.constant 0 : index
        %57 = vector.load %arg10[%c16_40, %c0_41] : memref<32x1xf32, #tpu.memory_space<vmem>>, vector<8x1xf32>
        tpu.vector_store %arg10[%c16_40, %c0_41], %49 {strides = array<i32>} : memref<32x1xf32, #tpu.memory_space<vmem>>, vector<8x1xf32>,
        %c16_42 = arith.constant 16 : index
        %c0_43 = arith.constant 0 : index
        %58 = vector.load %arg11[%c16_42, %c0_43] : memref<32x1xf32, #tpu.memory_space<vmem>>, vector<8x1xf32>
        tpu.vector_store %arg11[%c16_42, %c0_43], %52 {strides = array<i32>} : memref<32x1xf32, #tpu.memory_space<vmem>>, vector<8x1xf32>,
        %c24_44 = arith.constant 24 : index
        %c0_45 = arith.constant 0 : index
        %59 = vector.load %arg10[%c24_44, %c0_45] : memref<32x1xf32, #tpu.memory_space<vmem>>, vector<8x1xf32>
        tpu.vector_store %arg10[%c24_44, %c0_45], %49 {strides = array<i32>} : memref<32x1xf32, #tpu.memory_space<vmem>>, vector<8x1xf32>,
        %c24_46 = arith.constant 24 : index
        %c0_47 = arith.constant 0 : index
        %60 = vector.load %arg11[%c24_46, %c0_47] : memref<32x1xf32, #tpu.memory_space<vmem>>, vector<8x1xf32>
        tpu.vector_store %arg11[%c24_46, %c0_47], %52 {strides = array<i32>} : memref<32x1xf32, #tpu.memory_space<vmem>>, vector<8x1xf32>,
      } else {
      }
      %9 = arith.index_cast %arg1 : i32 to index
      %c0 = arith.constant 0 : index
      %c0_4 = arith.constant 0 : index
      %10 = vector.load %arg7[%9, %c0, %c0_4] : memref<1x32x512xbf16, #tpu.memory_space<vmem>>, vector<1x32x512xbf16>
      %11 = vector.shape_cast %10 : vector<1x32x512xbf16> to vector<32x512xbf16>
      %12 = arith.extf %11 : vector<32x512xbf16> to vector<32x512xf32>
      %c0_5 = arith.constant 0 : index
      %c0_6 = arith.constant 0 : index
      %13 = vector.load %arg10[%c0_5, %c0_6] : memref<32x1xf32, #tpu.memory_space<vmem>>, vector<32x1xf32>
      %14 = vector.broadcast %13 : vector<32x1xf32> to vector<32x512xf32>
      %15 = arith.mulf %12, %14 : vector<32x512xf32>
      %c0_7 = arith.constant 0 : index
      %c0_8 = arith.constant 0 : index
      %16 = vector.load %arg11[%c0_7, %c0_8] : memref<32x1xf32, #tpu.memory_space<vmem>>, vector<32x1xf32>
      %17 = vector.broadcast %16 : vector<32x1xf32> to vector<32x512xf32>
      %18 = arith.addf %15, %17 : vector<32x512xf32>
      %cst = arith.constant 0.000000e+00 : f32
      %19 = vector.broadcast %cst : f32 to vector<32x512xf32>
      %20 = arith.maximumf %18, %19 : vector<32x512xf32>
      %21 = arith.truncf %20 : vector<32x512xf32> to vector<32x512xbf16>
      %c0_9 = arith.constant 0 : index
      %c0_10 = arith.constant 0 : index
      %22 = vector.load %arg6[%c0_9, %c0_10] : memref<32x512xbf16, #tpu.memory_space<vmem>>, vector<32x512xbf16>
      tpu.vector_store %arg6[%c0_9, %c0_10], %21 {strides = array<i32>} : memref<32x512xbf16, #tpu.memory_space<vmem>>, vector<32x512xbf16>,
    } else {
    }
    return
  }
  func.func @transform_0(%arg0: i32, %arg1: i32) -> (i32, i32) {
    %c1_i32 = arith.constant 1 : i32
    %0 = arith.subi %c1_i32, %arg0 : i32
    %1 = arith.muli %arg1, %0 : i32
    %c0_i32 = arith.constant 0 : i32
    %c0_i32_0 = arith.constant 0 : i32
    return %c0_i32, %1 : i32, i32
  }
  func.func @transform_1(%arg0: i32, %arg1: i32) -> (i32, i32) {
    %c0_i32 = arith.constant 0 : i32
    %c0_i32_0 = arith.constant 0 : i32
    %c0_i32_1 = arith.constant 0 : i32
    return %c0_i32, %c0_i32_0 : i32, i32
  }
  func.func @transform_2(%arg0: i32, %arg1: i32) -> (i32, i32) {
    %c0_i32 = arith.constant 0 : i32
    %c0_i32_0 = arith.constant 0 : i32
    %c0_i32_1 = arith.constant 0 : i32
    return %c0_i32, %c0_i32_0 : i32, i32
  }
  func.func @transform_3(%arg0: i32, %arg1: i32) -> (i32, i32) {
    %c0_i32 = arith.constant 0 : i32
    %c0_i32_0 = arith.constant 0 : i32
    %c0_i32_1 = arith.constant 0 : i32
    return %c0_i32, %c0_i32_0 : i32, i32
  }
  func.func @transform_4(%arg0: i32, %arg1: i32) -> (i32, i32) {
    %0 = arith.muli %arg1, %arg0 : i32
    %c0_i32 = arith.constant 0 : i32
    %c0_i32_0 = arith.constant 0 : i32
    return %c0_i32, %0 : i32, i32
  }
}

</mosaic_0001>

<llo_original>
// kernel: deconv_bn_act.1
$region0: #{deconv_bn_act.1}
  #allocation0 [shape = 'u32[]', space=smem, size = 0x4, offset = 0x4, fixed_abs, tag = 'smem constant byte address 0x4 - core index']
  #allocation1 [shape = 'u32[144,128]{1,0:T(1,128)}', space=vmem, size = 0x12000, scoped, tag = 'internal scratch']
  #allocation2 [shape = 'bf16[1,32,512]{2,1,0:T(16,128)(2,1)}', space=vmem, size = 0x8000, scoped, tag = 'scratch operand']
  #allocation3 [shape = 'f32[32,1]{1,0:T(8,128)}', space=vmem, size = 0x4000, scoped, tag = 'scratch operand']
  #allocation4 [shape = 'f32[32,1]{1,0:T(8,128)}', space=vmem, size = 0x4000, scoped, tag = 'scratch operand']
  #allocation5 [shape = 'f32[32,1]{1,0:T(8,128)}', space=vmem, size = 0x4000, scoped, tag = 'scratch operand']
  #allocation6 [shape = 'f32[32,1]{1,0:T(8,128)}', space=vmem, size = 0x4000, scoped, tag = 'scratch operand']
  %s0 = inlined_call_operand.vmem [shape: bf16[8,512], index: 0, kind: input, shape index: {}]
  %s1 = inlined_call_operand.vmem [shape: f32[32,32], index: 1, kind: input, shape index: {}]
  %s2 = inlined_call_operand.vmem [shape: f32[8,1], index: 2, kind: input, shape index: {}]
  %s3 = inlined_call_operand.vmem [shape: f32[8,1], index: 3, kind: input, shape index: {}]
  %s4 = inlined_call_operand.vmem [shape: bf16[32,512], index: 4, kind: output, shape index: {}]
  %s5 = sld [smem:[#allocation0]]
  $region65: #{deconv_bn_act.1} parent=0
    _
  %s7 = ssub.s32 1, %s5
  %s8 = scalar_select 0, %s7, %s5
  loop: start=0, step=1, limit=4
  $region2: #{deconv_bn_act.1} parent=0 // loop_pre_header
    _
  $region3: #{deconv_bn_act.1} parent=0 // loop_header
    %s10 = sphi 0, %s14
    %p11 = scmp.ge.s32.totalorder %s10, 4
    %s17 = sphi 0, %s29
    %s18 = sphi 0, %s25
    %s19 = sphi 0, %s17
    %s20 = sphi 0, %s18
    %s21 = sphi 0, %s19
    %s22 = sphi 0, %s20
    %s36 = sphi 0, %s38
    %s39 = sphi 0, %s36
    %s40 = sphi 0, %s39
    %s56 = sphi 0, %s40
    %s60 = sphi 0, %s60
    %s62 = sphi 0, %s60
    %s63 = sphi 0, %s62
    %s77 = sphi 0, %s63
    %s81 = sphi 0, %s81
    %s83 = sphi 0, %s81
    %s84 = sphi 0, %s83
    %s98 = sphi 0, %s84
    %s102 = sphi 0, %s102
    %s104 = sphi 0, %s102
    %s105 = sphi 0, %s104
    %s119 = sphi 0, %s105
    %s127 = sphi 0, %s129
    %s130 = sphi 0, %s127
    %s131 = sphi 0, %s130
    %s147 = sphi 0, %s131
  $region4: #{deconv_bn_act.1} parent=0 // loop_header_branch
    %13 = sbr.rel (%p11) target = $region8
  $region5: #{deconv_bn_act.1} parent=0 // loop_body
    %s15 = ssub.s32 %s10, 1
    %s16 = ssub.s32 %s10, 2
    %s23 = sadd.s32 1, %s18
    %p24 = scmp.ge.s32.totalorder %s23, 1
    %s25 = scalar_select %p24, 0, %s23
    %s26 = sadd.s32 1, %s17
    %s27 = scalar_select %p24, %s26, %s17
    %p28 = scmp.ge.s32.totalorder %s27, 2
    %s29 = scalar_select %p28, 0, %s27
    %s30 = ssub.s32 1, %s17
    %s31 = smul.u32 %s18, %s30
    %s32 = ssub.s32 1, %s29
    %s33 = smul.u32 %s25, %s32
    %s34 = ssub.s32 %s31, %s33
    %p35 = scmp.eq.s32.totalorder %s34, 0
    %s37 = sadd.s32 %s36, 1
    %s38 = scalar_select %p35, %s36, %s37
    %p41 = pneg %p35
    %p42 = scmp.eq.s32.totalorder %s10, 1
    %p43 = por %p41, %p42
    %p44 = scmp.ne.s32.totalorder %s36, %s39
    %p45 = scmp.eq.s32.totalorder %s10, 0
    %p46 = por %p44, %p45
    %p47 = scmp.ne.s32.totalorder %s36, %s39
    %p48 = scmp.eq.s32.totalorder %s15, 1
    %p49 = por %p47, %p48
    %p50 = scmp.ne.s32.totalorder %s39, %s40
    %p51 = scmp.eq.s32.totalorder %s15, 0
    %p52 = por %p50, %p51
    %p53 = scmp.ne.s32.totalorder %s39, %s40
    %p54 = scmp.eq.s32.totalorder %s16, 1
    %p55 = por %p53, %p54
    %p57 = scmp.ne.s32.totalorder %s40, %s56
    %p58 = scmp.eq.s32.totalorder %s16, 0
    %p59 = por %p57, %p58
    %s61 = sadd.s32 %s60, 1
    %p64 = scmp.eq.s32.totalorder %s10, 1
    %p65 = scmp.ne.s32.totalorder %s60, %s62
    %p66 = scmp.eq.s32.totalorder %s10, 0
    %p67 = por %p65, %p66
    %p68 = scmp.ne.s32.totalorder %s60, %s62
    %p69 = scmp.eq.s32.totalorder %s15, 1
    %p70 = por %p68, %p69
    %p71 = scmp.ne.s32.totalorder %s62, %s63
    %p72 = scmp.eq.s32.totalorder %s15, 0
    %p73 = por %p71, %p72
    %p74 = scmp.ne.s32.totalorder %s62, %s63
    %p75 = scmp.eq.s32.totalorder %s16, 1
    %p76 = por %p74, %p75
    %p78 = scmp.ne.s32.totalorder %s63, %s77
    %p79 = scmp.eq.s32.totalorder %s16, 0
    %p80 = por %p78, %p79
    %s82 = sadd.s32 %s81, 1
    %p85 = scmp.eq.s32.totalorder %s10, 1
    %p86 = scmp.ne.s32.totalorder %s81, %s83
    %p87 = scmp.eq.s32.totalorder %s10, 0
    %p88 = por %p86, %p87
    %p89 = scmp.ne.s32.totalorder %s81, %s83
    %p90 = scmp.eq.s32.totalorder %s15, 1
    %p91 = por %p89, %p90
    %p92 = scmp.ne.s32.totalorder %s83, %s84
    %p93 = scmp.eq.s32.totalorder %s15, 0
    %p94 = por %p92, %p93
    %p95 = scmp.ne.s32.totalorder %s83, %s84
    %p96 = scmp.eq.s32.totalorder %s16, 1
    %p97 = por %p95, %p96
    %p99 = scmp.ne.s32.totalorder %s84, %s98
    %p100 = scmp.eq.s32.totalorder %s16, 0
    %p101 = por %p99, %p100
    %s103 = sadd.s32 %s102, 1
    %p106 = scmp.eq.s32.totalorder %s10, 1
    %p107 = scmp.ne.s32.totalorder %s102, %s104
    %p108 = scmp.eq.s32.totalorder %s10, 0
    %p109 = por %p107, %p108
    %p110 = scmp.ne.s32.totalorder %s102, %s104
    %p111 = scmp.eq.s32.totalorder %s15, 1
    %p112 = por %p110, %p111
    %p113 = scmp.ne.s32.totalorder %s104, %s105
    %p114 = scmp.eq.s32.totalorder %s15, 0
    %p115 = por %p113, %p114
    %p116 = scmp.ne.s32.totalorder %s104, %s105
    %p117 = scmp.eq.s32.totalorder %s16, 1
    %p118 = por %p116, %p117
    %p120 = scmp.ne.s32.totalorder %s105, %s119
    %p121 = scmp.eq.s32.totalorder %s16, 0
    %p122 = por %p120, %p121
    %s123 = smul.u32 %s18, %s17
    %s124 = smul.u32 %s25, %s29
    %s125 = ssub.s32 %s123, %s124
    %p126 = scmp.eq.s32.totalorder %s125, 0
    %s128 = sadd.s32 %s127, 1
    %s129 = scalar_select %p126, %s127, %s128
    %p132 = pneg %p126
    %p133 = scmp.eq.s32.totalorder %s10, 1
    %p134 = por %p132, %p133
    %p135 = scmp.ne.s32.totalorder %s127, %s130
    %p136 = scmp.eq.s32.totalorder %s10, 0
    %p137 = por %p135, %p136
    %p138 = scmp.ne.s32.totalorder %s127, %s130
    %p139 = scmp.eq.s32.totalorder %s15, 1
    %p140 = por %p138, %p139
    %p141 = scmp.ne.s32.totalorder %s130, %s131
    %p142 = scmp.eq.s32.totalorder %s15, 0
    %p143 = por %p141, %p142
    %p144 = scmp.ne.s32.totalorder %s130, %s131
    %p145 = scmp.eq.s32.totalorder %s16, 1
    %p146 = por %p144, %p145
    %p148 = scmp.ne.s32.totalorder %s131, %s147
    %p149 = scmp.eq.s32.totalorder %s16, 0
    %p150 = por %p148, %p149
    %p151 = scmp.le.s32.totalorder 1, %s10
    %p152 = scmp.lt.s32.totalorder %s10, 3
    %p153 = pnand %p151, %p152
    %p154 = pneg %p153
    // Predicated region
    $region9: #{deconv_bn_act.1} parent=5 // pred_check
      _
    $region10: #{deconv_bn_act.1} parent=5 // pred_check_branch
      %156 = sbr.rel (%p153) target = $region12
    $region11: #{deconv_bn_act.1} parent=5 // pred_region
      %s157 = ssub.s32 %s10, 1
      // Predicated region
      $region13: #{deconv_bn_act.1} parent=11 // pred_check
        %p158 = pneg %p73
      $region14: #{deconv_bn_act.1} parent=11 // pred_check_branch
        %160 = sbr.rel (%p158) target = $region16
      $region15: #{deconv_bn_act.1} parent=11 // pred_region
        _
      $region16: #{deconv_bn_act.1} parent=11 // pred_fallthru
        _
      // Predicated region
      $region17: #{deconv_bn_act.1} parent=11 // pred_check
        %p161 = pneg %p94
      $region18: #{deconv_bn_act.1} parent=11 // pred_check_branch
        %163 = sbr.rel (%p161) target = $region20
      $region19: #{deconv_bn_act.1} parent=11 // pred_region
        _
      $region20: #{deconv_bn_act.1} parent=11 // pred_fallthru
        _
      // Predicated region
      $region21: #{deconv_bn_act.1} parent=11 // pred_check
        %p164 = pneg %p115
      $region22: #{deconv_bn_act.1} parent=11 // pred_check_branch
        %166 = sbr.rel (%p164) target = $region24
      $region23: #{deconv_bn_act.1} parent=11 // pred_region
        _
      $region24: #{deconv_bn_act.1} parent=11 // pred_fallthru
        _
    $region12: #{deconv_bn_act.1} parent=5 // pred_fallthru
      _
    %p167 = scmp.lt.s32.totalorder %s10, 2
    // Predicated region
    $region25: #{deconv_bn_act.1} parent=5 // pred_check
      %p168 = pneg %p167
    $region26: #{deconv_bn_act.1} parent=5 // pred_check_branch
      %170 = sbr.rel (%p168) target = $region28
    $region27: #{deconv_bn_act.1} parent=5 // pred_region
      // Predicated region
      $region29: #{deconv_bn_act.1} parent=27 // pred_check
        %p171 = pneg %p46
      $region30: #{deconv_bn_act.1} parent=27 // pred_check_branch
        %173 = sbr.rel (%p171) target = $region32
      $region31: #{deconv_bn_act.1} parent=27 // pred_region
        %s174 = ssub.s32 1, %s17
        %s175 = smul.u32 %s18, %s174
        %s176 = smul.u32 4, %s175
        %p177 = scmp.lt.s32.totalorder %s176, 3
        %s178 = scalar_select %p177, %s176, 3
        %s179 = smul.addr %s178, 4
        %s180 = scalar_lea.vmem %s0, %s179
        %s181 = ssub.s32 1, %s17
        %s182 = smul.u32 %s18, %s181
        %s183 = smul.u32 4, %s182
      $region32: #{deconv_bn_act.1} parent=27 // pred_fallthru
        _
    $region28: #{deconv_bn_act.1} parent=5 // pred_fallthru
      _
    %p184 = scmp.le.s32.totalorder 1, %s10
    %p185 = scmp.lt.s32.totalorder %s10, 3
    %p186 = pnand %p184, %p185
    %p187 = pneg %p186
    // Predicated region
    $region33: #{deconv_bn_act.1} parent=5 // pred_check
      _
    $region34: #{deconv_bn_act.1} parent=5 // pred_check_branch
      %189 = sbr.rel (%p186) target = $region36
    $region35: #{deconv_bn_act.1} parent=5 // pred_region
      %s190 = ssub.s32 %s10, 1
      %s191 = ssub.s32 1, %s19
      %s192 = smul.u32 %s20, %s191
      %s193 = smul.u32 4, %s192
      %p194 = scmp.lt.s32.totalorder %s193, 3
      %s195 = scalar_select %p194, %s193, 3
      %s196 = smul.addr %s195, 4
      %s197 = scalar_lea.vmem %s0, %s196
      %p198 = pneg %p52
      %p199 = pneg %p49
      %p200 = pneg %p73
      %p201 = pneg %p70
      %p202 = pneg %p94
      %p203 = pneg %p91
      %p204 = pneg %p115
      %p205 = pneg %p112
      %p206 = pneg %p143
      %p207 = pneg %p140
      %s208 = smul.u32 %s20, %s19
      %s209 = smul.u32 4, %s208
      %p210 = scmp.lt.s32.totalorder %s209, 3
      %s211 = scalar_select %p210, %s209, 3
      %s212 = smul.addr %s211, 4
      %s213 = scalar_lea.vmem %s4, %s212
      %s214 = ssub.s32 1, %s19
      %s215 = smul.u32 %s20, %s214
      %s216 = smul.u32 4, %s215
      %p217 = scmp.lt.s32.totalorder %s216, 3
      %s218 = scalar_select %p217, %s216, 3
      %s219 = smul.addr %s218, 4
      %s220 = scalar_lea.vmem %s0, %s219
      %s221 = ssub.s32 1, %s19
      %s222 = smul.u32 %s20, %s221
      %s223 = smul.u32 4, %s222
      %s224 = smul.u32 %s20, %s19
      %s225 = smul.u32 4, %s224
      %p226 = scmp.lt.s32.totalorder %s225, 3
      %s227 = scalar_select %p226, %s225, 3
      %s228 = smul.addr %s227, 4
      %s229 = scalar_lea.vmem %s4, %s228
      %s230 = smul.u32 %s20, %s19
      %s231 = smul.u32 4, %s230
      %p232 = scmp.eq.s32.totalorder %s19, 0
      // Predicated region
      $region37: #{deconv_bn_act.1} parent=35 // pred_check
        %p233 = pneg %p232
      $region38: #{deconv_bn_act.1} parent=35 // pred_check_branch
        %235 = sbr.rel (%p233) target = $region40
      $region39: #{deconv_bn_act.1} parent=35 // pred_region
        %p236 = scmp.eq.s32.totalorder %s20, 0
        // Predicated region
        $region41: #{deconv_bn_act.1} parent=39 // pred_check
          %p237 = pneg %p236
        $region42: #{deconv_bn_act.1} parent=39 // pred_check_branch
          %239 = sbr.rel (%p237) target = $region44
        $region43: #{deconv_bn_act.1} parent=39 // pred_region
          %vm240 = vcmask 7168
          %241 = vst.msk [vmem:[#allocation3] sm:$0xff] %vm240, 0.0
          %242 = vst.msk [vmem:[#allocation3 + $0x8] sm:$0xff] %vm240, 0.0
          %243 = vst.msk [vmem:[#allocation3 + $0x10] sm:$0xff] %vm240, 0.0
          %244 = vst.msk [vmem:[#allocation3 + $0x18] sm:$0xff] %vm240, 0.0
          %245 = vst.msk [vmem:[#allocation4] sm:$0xff] %vm240, 0.0
          %246 = vst.msk [vmem:[#allocation4 + $0x8] sm:$0xff] %vm240, 0.0
          %247 = vst.msk [vmem:[#allocation4 + $0x10] sm:$0xff] %vm240, 0.0
          %248 = vst.msk [vmem:[#allocation4 + $0x18] sm:$0xff] %vm240, 0.0
        $region44: #{deconv_bn_act.1} parent=39 // pred_fallthru
          _
        %v249 = vlaneseq
        %v250 = vand.u32 %v249, 127
        %v251 = vadd.s32 %v250, 128
        %v252 = vadd.s32 %v250, 256
        %v253 = vadd.s32 %v250, 384
        %vm254 = vcmp.lt.s32.totalorder %v250, 0
        %v255 = vsub.s32 0, %v250
        %v256 = vsel %vm254, %v255, %v250
        %v257 = vshrl.u32 %v256, 4
        %v258 = vand.u32 %v256, 15
        %v259 = vsub.s32 0, %v258
        %v260 = vsel %vm254, %v259, %v258
        %vm261 = vcmp.lt.s32.totalorder %v251, 0
        %v262 = vsub.s32 0, %v251
        %v263 = vsel %vm261, %v262, %v251
        %v264 = vshrl.u32 %v263, 4
        %v265 = vand.u32 %v263, 15
        %v266 = vsub.s32 0, %v265
        %v267 = vsel %vm261, %v266, %v265
        %vm268 = vcmp.lt.s32.totalorder %v252, 0
        %v269 = vsub.s32 0, %v252
        %v270 = vsel %vm268, %v269, %v252
        %v271 = vshrl.u32 %v270, 4
        %v272 = vand.u32 %v270, 15
        %v273 = vsub.s32 0, %v272
        %v274 = vsel %vm268, %v273, %v272
        %vm275 = vcmp.lt.s32.totalorder %v253, 0
        %v276 = vsub.s32 0, %v253
        %v277 = vsel %vm275, %v276, %v253
        %v278 = vshrl.u32 %v277, 4
        %v279 = vand.u32 %v277, 15
        %v280 = vsub.s32 0, %v279
        %v281 = vsel %vm275, %v280, %v279
        %vm282 = vcmp.ne.s32.totalorder %v260, 0
        %vm283 = vcmp.ne.s32.totalorder %v267, 0
        %vm284 = vcmp.ne.s32.totalorder %v274, 0
        %vm285 = vcmp.ne.s32.totalorder %v281, 0
        %vm286 = vcmp.lt.s32.totalorder %v260, 0
        %vm287 = vcmp.lt.s32.totalorder %v267, 0
        %vm288 = vcmp.lt.s32.totalorder %v274, 0
        %vm289 = vcmp.lt.s32.totalorder %v281, 0
        %vm290 = vmand %vm286, %vm282
        %vm291 = vmand %vm287, %vm283
        %vm292 = vmand %vm288, %vm284
        %vm293 = vmand %vm289, %vm285
        %v294 = vadd.s32 %v260, 16
        %v295 = vadd.s32 %v267, 16
        %v296 = vadd.s32 %v274, 16
        %v297 = vadd.s32 %v281, 16
        %v298 = vsel %vm290, %v294, %v260
        %v299 = vsel %vm291, %v295, %v267
        %v300 = vsel %vm292, %v296, %v274
        %v301 = vsel %vm293, %v297, %v281
        %vm302 = vcmp.ne.s32.totalorder %v298, 15
        %vm303 = vcmp.ne.s32.totalorder %v299, 15
        %vm304 = vcmp.ne.s32.totalorder %v300, 15
        %vm305 = vcmp.ne.s32.totalorder %v301, 15
        %vm306 = vcmp.lt.s32.totalorder %v250, 0
        %v307 = vsub.s32 0, %v250
        %v308 = vsel %vm306, %v307, %v250
        %v309 = vshrl.u32 %v308, 8
        %v310 = vand.u32 %v308, 255
        %v311 = vsub.s32 0, %v310
        %v312 = vsel %vm306, %v311, %v310
        %vm313 = vcmp.lt.s32.totalorder %v251, 0
        %v314 = vsub.s32 0, %v251
        %v315 = vsel %vm313, %v314, %v251
        %v316 = vshrl.u32 %v315, 8
        %v317 = vand.u32 %v315, 255
        %v318 = vsub.s32 0, %v317
        %v319 = vsel %vm313, %v318, %v317
        %vm320 = vcmp.lt.s32.totalorder %v252, 0
        %v321 = vsub.s32 0, %v252
        %v322 = vsel %vm320, %v321, %v252
        %v323 = vshrl.u32 %v322, 8
        %v324 = vand.u32 %v322, 255
        %v325 = vsub.s32 0, %v324
        %v326 = vsel %vm320, %v325, %v324
        %vm327 = vcmp.lt.s32.totalorder %v253, 0
        %v328 = vsub.s32 0, %v253
        %v329 = vsel %vm327, %v328, %v253
        %v330 = vshrl.u32 %v329, 8
        %v331 = vand.u32 %v329, 255
        %v332 = vsub.s32 0, %v331
        %v333 = vsel %vm327, %v332, %v331
        %vm334 = vcmp.ne.s32.totalorder %v312, 0
        %vm335 = vcmp.ne.s32.totalorder %v319, 0
        %vm336 = vcmp.ne.s32.totalorder %v326, 0
        %vm337 = vcmp.ne.s32.totalorder %v333, 0
        %vm338 = vcmp.lt.s32.totalorder %v312, 0
        %vm339 = vcmp.lt.s32.totalorder %v319, 0
        %vm340 = vcmp.lt.s32.totalorder %v326, 0
        %vm341 = vcmp.lt.s32.totalorder %v333, 0
        %vm342 = vmand %vm338, %vm334
        %vm343 = vmand %vm339, %vm335
        %vm344 = vmand %vm340, %vm336
        %vm345 = vmand %vm341, %vm337
        %v346 = vadd.s32 %v312, 256
        %v347 = vadd.s32 %v319, 256
        %v348 = vadd.s32 %v326, 256
        %v349 = vadd.s32 %v333, 256
        %v350 = vsel %vm342, %v346, %v312
        %v351 = vsel %vm343, %v347, %v319
        %v352 = vsel %vm344, %v348, %v326
        %v353 = vsel %vm345, %v349, %v333
        %vm354 = vcmp.lt.s32.totalorder %v350, 240
        %vm355 = vcmp.lt.s32.totalorder %v351, 240
        %vm356 = vcmp.lt.s32.totalorder %v352, 240
        %vm357 = vcmp.lt.s32.totalorder %v353, 240
        %v358 = vld [vmem:[%s220] sm:$0xff]
        %v359 = vld [vmem:[%s220 + $0x8] sm:$0xff]
        %v360 = vunpack.c.l.bf16 %v358
        %v361 = vunpack.c.h.bf16 %v358
        %v362 = vunpack.c.l.bf16 %v359
        %v363 = vunpack.c.h.bf16 %v359
        %364 = vrot.lane.b32.xlu0 %v360, 127
        %v365 = vpop.permute.xlu0 %364
        %366 = vrot.lane.b32.xlu0 %v361, 127
        %v367 = vpop.permute.xlu0 %366
        %368 = vrot.lane.b32.xlu0 %v362, 127
        %v369 = vpop.permute.xlu0 %368
        %370 = vrot.lane.b32.xlu0 %v363, 127
        %v371 = vpop.permute.xlu0 %370
        %vm372 = vcmp.lt.s32.totalorder %v250, 127
        %v373 = vsel %vm372, %v369, %v371
        %v374 = vsel %vm372, %v367, %v369
        %v375 = vsel %vm372, %v365, %v367
        %v376 = vsel %vm372, %v371, %v365
        %v377 = vsel %vm302, %v375, 0.0
        %v378 = vsel %vm303, %v374, 0.0
        %v379 = vsel %vm304, %v373, 0.0
        %v380 = vsel %vm305, %v376, 0.0
        %381 = vrot.lane.b32.xlu0 %v360, 112
        %v382 = vpop.permute.xlu0 %381
        %383 = vrot.lane.b32.xlu0 %v361, 112
        %v384 = vpop.permute.xlu0 %383
        %385 = vrot.lane.b32.xlu0 %v362, 112
        %v386 = vpop.permute.xlu0 %385
        %387 = vrot.lane.b32.xlu0 %v363, 112
        %v388 = vpop.permute.xlu0 %387
        %vm389 = vcmp.lt.s32.totalorder %v250, 112
        %v390 = vsel %vm389, %v386, %v388
        %v391 = vsel %vm389, %v384, %v386
        %v392 = vsel %vm389, %v382, %v384
        %v393 = vsel %vm389, %v388, %v382
        %v394 = vsel %vm354, %v392, 0.0
        %v395 = vsel %vm355, %v391, 0.0
        %v396 = vsel %vm356, %v390, 0.0
        %v397 = vsel %vm357, %v393, 0.0
        %vm398 = vmand %vm354, %vm302
        %vm399 = vmand %vm355, %vm303
        %vm400 = vmand %vm356, %vm304
        %vm401 = vmand %vm357, %vm305
        %402 = vrot.lane.b32.xlu0 %v360, 111
        %v403 = vpop.permute.xlu0 %402
        %404 = vrot.lane.b32.xlu0 %v361, 111
        %v405 = vpop.permute.xlu0 %404
        %406 = vrot.lane.b32.xlu0 %v362, 111
        %v407 = vpop.permute.xlu0 %406
        %408 = vrot.lane.b32.xlu0 %v363, 111
        %v409 = vpop.permute.xlu0 %408
        %vm410 = vcmp.lt.s32.totalorder %v250, 111
        %v411 = vsel %vm410, %v407, %v409
        %v412 = vsel %vm410, %v405, %v407
        %v413 = vsel %vm410, %v403, %v405
        %v414 = vsel %vm410, %v409, %v403
        %v415 = vsel %vm398, %v413, 0.0
        %v416 = vsel %vm399, %v412, 0.0
        %v417 = vsel %vm400, %v411, 0.0
        %v418 = vsel %vm401, %v414, 0.0
        %v419 = vld [vmem:[%s1] sm:$0xff]
        %v420 = vld [vmem:[%s1 + $0x8] sm:$0xff]
        %v421 = vld [vmem:[%s1 + $0x10] sm:$0xff]
        %v422 = vld [vmem:[%s1 + $0x18] sm:$0xff]
        %427 = vrot.lane.b32.xlu0 %v419, 120
        %v428 = vpop.permute.xlu0 %427
        %429 = vrot.lane.b32.xlu0 %v420, 120
        %v430 = vpop.permute.xlu0 %429
        %431 = vrot.lane.b32.xlu0 %v421, 120
        %v432 = vpop.permute.xlu0 %431
        %433 = vrot.lane.b32.xlu0 %v422, 120
        %v434 = vpop.permute.xlu0 %433
        %vm435 = vcmask 64512
        %v436 = vsel %vm435, %v428, 0
        %v438 = vsel %vm435, %v430, 0
        %v440 = vsel %vm435, %v432, 0
        %v442 = vsel %vm435, %v434, 0
        %444 = vmatprep.subr.mxu0 %v378
        %445 = vmatpush1.msra.mxu0 %v377
        %446 = vmatprep.subr.mxu0 0.0
        %447 = vmatpush1.msra.mxu0 0.0
        %448 = vmatprep.subr.mxu0 0.0
        %449 = vmatpush1.msra.mxu0 0.0
        %450 = vmatprep.subr.mxu0 0.0
        %451 = vmatpush1.msra.mxu0 0.0
        %452 = vmatprep.subr.mxu0 0.0
        %453 = vmatpush1.msra.mxu0 0.0
        %454 = vmatprep.subr.mxu0 0.0
        %455 = vmatpush1.msra.mxu0 0.0
        %456 = vmatprep.subr.mxu0 0.0
        %457 = vmatpush1.msra.mxu0 0.0
        %458 = vmatprep.subr.mxu0 0.0
        %459 = vmatpush1.msra.mxu0 0.0
        %460 = vmatprep.subr.mxu0 0.0
        %461 = vmatpush1.msra.mxu0 0.0
        %462 = vmatprep.subr.mxu0 0.0
        %463 = vmatpush1.msra.mxu0 0.0
        %464 = vmatprep.subr.mxu0 0.0
        %465 = vmatpush1.msra.mxu0 0.0
        %466 = vmatprep.subr.mxu0 0.0
        %467 = vmatpush1.msra.mxu0 0.0
        %468 = vmatprep.subr.mxu0 0.0
        %469 = vmatpush1.msra.mxu0 0.0
        %470 = vmatprep.subr.mxu0 0.0
        %471 = vmatpush1.msra.mxu0 0.0
        %472 = vmatprep.subr.mxu0 0.0
        %473 = vmatpush1.msra.mxu0 0.0
        %474 = vmatprep.subr.mxu0 0.0
        %475 = vmatpush1.msra.mxu0 0.0
        %476 = vmatprep.subr.mxu0 0.0
        %477 = vmatpush1.msra.mxu0 0.0
        %478 = vmatprep.subr.mxu0 0.0
        %479 = vmatpush1.msra.mxu0 0.0
        %480 = vmatprep.subr.mxu0 0.0
        %481 = vmatpush1.msra.mxu0 0.0
        %482 = vmatprep.subr.mxu0 0.0
        %483 = vmatpush1.msra.mxu0 0.0
        %484 = vmatprep.subr.mxu0 0.0
        %485 = vmatpush1.msra.mxu0 0.0
        %486 = vmatprep.subr.mxu0 0.0
        %487 = vmatpush1.msra.mxu0 0.0
        %488 = vmatprep.subr.mxu0 0.0
        %489 = vmatpush1.msra.mxu0 0.0
        %490 = vmatprep.subr.mxu0 0.0
        %491 = vmatpush1.msra.mxu0 0.0
        %492 = vmatprep.subr.mxu0 0.0
        %493 = vmatpush1.msra.mxu0 0.0
        %494 = vmatprep.subr.mxu0 0.0
        %495 = vmatpush1.msra.mxu0 0.0
        %496 = vmatprep.subr.mxu0 0.0
        %497 = vmatpush1.msra.mxu0 0.0
        %498 = vmatprep.subr.mxu0 0.0
        %499 = vmatpush1.msra.mxu0 0.0
        %500 = vmatprep.subr.mxu0 0.0
        %501 = vmatpush1.msra.mxu0 0.0
        %502 = vmatprep.subr.mxu0 0.0
        %503 = vmatpush1.msra.mxu0 0.0
        %504 = vmatprep.subr.mxu0 0.0
        %505 = vmatpush1.msra.mxu0 0.0
        %506 = vmatprep.subr.mxu0 0.0
        %507 = vmatpush1.msra.mxu0 0.0
        %508 = vmatprep.mubr.f32.mxu0 0.0
        %509 = vmatmul.mubr.f32.gmra.mrb[0].mxu0 %v436
        %v510 = vpop.f32.mrb[0].mxu0
        %v511 = vadd.f32 0.0, %v510
        %v512 = vpop.f32.mrb[0].mxu0
        %v513 = vadd.f32 0.0, %v512
        %514 = vmatprep.mubr.f32.mxu0 0.0
        %515 = vmatmul.mubr.f32.gmra.mrb[0].mxu0 %v438
        %v516 = vpop.f32.mrb[0].mxu0
        %v517 = vadd.f32 0.0, %v516
        %v518 = vpop.f32.mrb[0].mxu0
        %v519 = vadd.f32 0.0, %v518
        %520 = vmatprep.mubr.f32.mxu0 0.0
        %521 = vmatmul.mubr.f32.gmra.mrb[0].mxu0 %v440
        %v522 = vpop.f32.mrb[0].mxu0
        %v523 = vadd.f32 0.0, %v522
        %v524 = vpop.f32.mrb[0].mxu0
        %v525 = vadd.f32 0.0, %v524
        %526 = vmatprep.mubr.f32.mxu0 0.0
        %527 = vmatmul.mubr.f32.gmra.mrb[0].mxu0 %v442
        %v528 = vpop.f32.mrb[0].mxu0
        %v529 = vadd.f32 0.0, %v528
        %v530 = vpop.f32.mrb[0].mxu0
        %v531 = vadd.f32 0.0, %v530
        %532 = vdwg.mxu0
        %533 = vmatprep.subr.mxu0 %v380
        %534 = vmatpush1.msra.mxu0 %v379
        %535 = vmatprep.subr.mxu0 0.0
        %536 = vmatpush1.msra.mxu0 0.0
        %537 = vmatprep.subr.mxu0 0.0
        %538 = vmatpush1.msra.mxu0 0.0
        %539 = vmatprep.subr.mxu0 0.0
        %540 = vmatpush1.msra.mxu0 0.0
        %541 = vmatprep.subr.mxu0 0.0
        %542 = vmatpush1.msra.mxu0 0.0
        %543 = vmatprep.subr.mxu0 0.0
        %544 = vmatpush1.msra.mxu0 0.0
        %545 = vmatprep.subr.mxu0 0.0
        %546 = vmatpush1.msra.mxu0 0.0
        %547 = vmatprep.subr.mxu0 0.0
        %548 = vmatpush1.msra.mxu0 0.0
        %549 = vmatprep.subr.mxu0 0.0
        %550 = vmatpush1.msra.mxu0 0.0
        %551 = vmatprep.subr.mxu0 0.0
        %552 = vmatpush1.msra.mxu0 0.0
        %553 = vmatprep.subr.mxu0 0.0
        %554 = vmatpush1.msra.mxu0 0.0
        %555 = vmatprep.subr.mxu0 0.0
        %556 = vmatpush1.msra.mxu0 0.0
        %557 = vmatprep.subr.mxu0 0.0
        %558 = vmatpush1.msra.mxu0 0.0
        %559 = vmatprep.subr.mxu0 0.0
        %560 = vmatpush1.msra.mxu0 0.0
        %561 = vmatprep.subr.mxu0 0.0
        %562 = vmatpush1.msra.mxu0 0.0
        %563 = vmatprep.subr.mxu0 0.0
        %564 = vmatpush1.msra.mxu0 0.0
        %565 = vmatprep.subr.mxu0 0.0
        %566 = vmatpush1.msra.mxu0 0.0
        %567 = vmatprep.subr.mxu0 0.0
        %568 = vmatpush1.msra.mxu0 0.0
        %569 = vmatprep.subr.mxu0 0.0
        %570 = vmatpush1.msra.mxu0 0.0
        %571 = vmatprep.subr.mxu0 0.0
        %572 = vmatpush1.msra.mxu0 0.0
        %573 = vmatprep.subr.mxu0 0.0
        %574 = vmatpush1.msra.mxu0 0.0
        %575 = vmatprep.subr.mxu0 0.0
        %576 = vmatpush1.msra.mxu0 0.0
        %577 = vmatprep.subr.mxu0 0.0
        %578 = vmatpush1.msra.mxu0 0.0
        %579 = vmatprep.subr.mxu0 0.0
        %580 = vmatpush1.msra.mxu0 0.0
        %581 = vmatprep.subr.mxu0 0.0
        %582 = vmatpush1.msra.mxu0 0.0
        %583 = vmatprep.subr.mxu0 0.0
        %584 = vmatpush1.msra.mxu0 0.0
        %585 = vmatprep.subr.mxu0 0.0
        %586 = vmatpush1.msra.mxu0 0.0
        %587 = vmatprep.subr.mxu0 0.0
        %588 = vmatpush1.msra.mxu0 0.0
        %589 = vmatprep.subr.mxu0 0.0
        %590 = vmatpush1.msra.mxu0 0.0
        %591 = vmatprep.subr.mxu0 0.0
        %592 = vmatpush1.msra.mxu0 0.0
        %593 = vmatprep.subr.mxu0 0.0
        %594 = vmatpush1.msra.mxu0 0.0
        %595 = vmatprep.subr.mxu0 0.0
        %596 = vmatpush1.msra.mxu0 0.0
        %597 = vmatprep.mubr.f32.mxu0 0.0
        %598 = vmatmul.mubr.f32.gmra.mrb[0].mxu0 %v436
        %v599 = vpop.f32.mrb[0].mxu0
        %v600 = vadd.f32 0.0, %v599
        %v601 = vpop.f32.mrb[0].mxu0
        %v602 = vadd.f32 0.0, %v601
        %603 = vmatprep.mubr.f32.mxu0 0.0
        %604 = vmatmul.mubr.f32.gmra.mrb[0].mxu0 %v438
        %v605 = vpop.f32.mrb[0].mxu0
        %v606 = vadd.f32 0.0, %v605
        %v607 = vpop.f32.mrb[0].mxu0
        %v608 = vadd.f32 0.0, %v607
        %609 = vmatprep.mubr.f32.mxu0 0.0
        %610 = vmatmul.mubr.f32.gmra.mrb[0].mxu0 %v440
        %v611 = vpop.f32.mrb[0].mxu0
        %v612 = vadd.f32 0.0, %v611
        %v613 = vpop.f32.mrb[0].mxu0
        %v614 = vadd.f32 0.0, %v613
        %615 = vmatprep.mubr.f32.mxu0 0.0
        %616 = vmatmul.mubr.f32.gmra.mrb[0].mxu0 %v442
        %v617 = vpop.f32.mrb[0].mxu0
        %v618 = vadd.f32 0.0, %v617
        %v619 = vpop.f32.mrb[0].mxu0
        %v620 = vadd.f32 0.0, %v619
        %621 = vdwg.mxu0
        %v622 = vsel %vm435, %v419, 0
        %v624 = vsel %vm435, %v420, 0
        %v626 = vsel %vm435, %v421, 0
        %v628 = vsel %vm435, %v422, 0
        %630 = vmatprep.subr.mxu0 %v361
        %631 = vmatpush1.msra.mxu0 %v360
        %632 = vmatprep.subr.mxu0 0.0
        %633 = vmatpush1.msra.mxu0 0.0
        %634 = vmatprep.subr.mxu0 0.0
        %635 = vmatpush1.msra.mxu0 0.0
        %636 = vmatprep.subr.mxu0 0.0
        %637 = vmatpush1.msra.mxu0 0.0
        %638 = vmatprep.subr.mxu0 0.0
        %639 = vmatpush1.msra.mxu0 0.0
        %640 = vmatprep.subr.mxu0 0.0
        %641 = vmatpush1.msra.mxu0 0.0
        %642 = vmatprep.subr.mxu0 0.0
        %643 = vmatpush1.msra.mxu0 0.0
        %644 = vmatprep.subr.mxu0 0.0
        %645 = vmatpush1.msra.mxu0 0.0
        %646 = vmatprep.subr.mxu0 0.0
        %647 = vmatpush1.msra.mxu0 0.0
        %648 = vmatprep.subr.mxu0 0.0
        %649 = vmatpush1.msra.mxu0 0.0
        %650 = vmatprep.subr.mxu0 0.0
        %651 = vmatpush1.msra.mxu0 0.0
        %652 = vmatprep.subr.mxu0 0.0
        %653 = vmatpush1.msra.mxu0 0.0
        %654 = vmatprep.subr.mxu0 0.0
        %655 = vmatpush1.msra.mxu0 0.0
        %656 = vmatprep.subr.mxu0 0.0
        %657 = vmatpush1.msra.mxu0 0.0
        %658 = vmatprep.subr.mxu0 0.0
        %659 = vmatpush1.msra.mxu0 0.0
        %660 = vmatprep.subr.mxu0 0.0
        %661 = vmatpush1.msra.mxu0 0.0
        %662 = vmatprep.subr.mxu0 0.0
        %663 = vmatpush1.msra.mxu0 0.0
        %664 = vmatprep.subr.mxu0 0.0
        %665 = vmatpush1.msra.mxu0 0.0
        %666 = vmatprep.subr.mxu0 0.0
        %667 = vmatpush1.msra.mxu0 0.0
        %668 = vmatprep.subr.mxu0 0.0
        %669 = vmatpush1.msra.mxu0 0.0
        %670 = vmatprep.subr.mxu0 0.0
        %671 = vmatpush1.msra.mxu0 0.0
        %672 = vmatprep.subr.mxu0 0.0
        %673 = vmatpush1.msra.mxu0 0.0
        %674 = vmatprep.subr.mxu0 0.0
        %675 = vmatpush1.msra.mxu0 0.0
        %676 = vmatprep.subr.mxu0 0.0
        %677 = vmatpush1.msra.mxu0 0.0
        %678 = vmatprep.subr.mxu0 0.0
        %679 = vmatpush1.msra.mxu0 0.0
        %680 = vmatprep.subr.mxu0 0.0
        %681 = vmatpush1.msra.mxu0 0.0
        %682 = vmatprep.subr.mxu0 0.0
        %683 = vmatpush1.msra.mxu0 0.0
        %684 = vmatprep.subr.mxu0 0.0
        %685 = vmatpush1.msra.mxu0 0.0
        %686 = vmatprep.subr.mxu0 0.0
        %687 = vmatpush1.msra.mxu0 0.0
        %688 = vmatprep.subr.mxu0 0.0
        %689 = vmatpush1.msra.mxu0 0.0
        %690 = vmatprep.subr.mxu0 0.0
        %691 = vmatpush1.msra.mxu0 0.0
        %692 = vmatprep.subr.mxu0 0.0
        %693 = vmatpush1.msra.mxu0 0.0
        %694 = vmatprep.mubr.f32.mxu0 0.0
        %695 = vmatmul.mubr.f32.gmra.mrb[0].mxu0 %v622
        %v696 = vpop.f32.mrb[0].mxu0
        %v697 = vadd.f32 %v511, %v696
        %v698 = vpop.f32.mrb[0].mxu0
        %v699 = vadd.f32 %v513, %v698
        %700 = vmatprep.mubr.f32.mxu0 0.0
        %701 = vmatmul.mubr.f32.gmra.mrb[0].mxu0 %v624
        %v702 = vpop.f32.mrb[0].mxu0
        %v703 = vadd.f32 %v517, %v702
        %v704 = vpop.f32.mrb[0].mxu0
        %v705 = vadd.f32 %v519, %v704
        %706 = vmatprep.mubr.f32.mxu0 0.0
        %707 = vmatmul.mubr.f32.gmra.mrb[0].mxu0 %v626
        %v708 = vpop.f32.mrb[0].mxu0
        %v709 = vadd.f32 %v523, %v708
        %v710 = vpop.f32.mrb[0].mxu0
        %v711 = vadd.f32 %v525, %v710
        %712 = vmatprep.mubr.f32.mxu0 0.0
        %713 = vmatmul.mubr.f32.gmra.mrb[0].mxu0 %v628
        %v714 = vpop.f32.mrb[0].mxu0
        %v715 = vadd.f32 %v529, %v714
        %v716 = vpop.f32.mrb[0].mxu0
        %v717 = vadd.f32 %v531, %v716
        %718 = vdwg.mxu0
        %719 = vmatprep.subr.mxu0 %v363
        %720 = vmatpush1.msra.mxu0 %v362
        %721 = vmatprep.subr.mxu0 0.0
        %722 = vmatpush1.msra.mxu0 0.0
        %723 = vmatprep.subr.mxu0 0.0
        %724 = vmatpush1.msra.mxu0 0.0
        %725 = vmatprep.subr.mxu0 0.0
        %726 = vmatpush1.msra.mxu0 0.0
        %727 = vmatprep.subr.mxu0 0.0
        %728 = vmatpush1.msra.mxu0 0.0
        %729 = vmatprep.subr.mxu0 0.0
        %730 = vmatpush1.msra.mxu0 0.0
        %731 = vmatprep.subr.mxu0 0.0
        %732 = vmatpush1.msra.mxu0 0.0
        %733 = vmatprep.subr.mxu0 0.0
        %734 = vmatpush1.msra.mxu0 0.0
        %735 = vmatprep.subr.mxu0 0.0
        %736 = vmatpush1.msra.mxu0 0.0
        %737 = vmatprep.subr.mxu0 0.0
        %738 = vmatpush1.msra.mxu0 0.0
        %739 = vmatprep.subr.mxu0 0.0
        %740 = vmatpush1.msra.mxu0 0.0
        %741 = vmatprep.subr.mxu0 0.0
        %742 = vmatpush1.msra.mxu0 0.0
        %743 = vmatprep.subr.mxu0 0.0
        %744 = vmatpush1.msra.mxu0 0.0
        %745 = vmatprep.subr.mxu0 0.0
        %746 = vmatpush1.msra.mxu0 0.0
        %747 = vmatprep.subr.mxu0 0.0
        %748 = vmatpush1.msra.mxu0 0.0
        %749 = vmatprep.subr.mxu0 0.0
        %750 = vmatpush1.msra.mxu0 0.0
        %751 = vmatprep.subr.mxu0 0.0
        %752 = vmatpush1.msra.mxu0 0.0
        %753 = vmatprep.subr.mxu0 0.0
        %754 = vmatpush1.msra.mxu0 0.0
        %755 = vmatprep.subr.mxu0 0.0
        %756 = vmatpush1.msra.mxu0 0.0
        %757 = vmatprep.subr.mxu0 0.0
        %758 = vmatpush1.msra.mxu0 0.0
        %759 = vmatprep.subr.mxu0 0.0
        %760 = vmatpush1.msra.mxu0 0.0
        %761 = vmatprep.subr.mxu0 0.0
        %762 = vmatpush1.msra.mxu0 0.0
        %763 = vmatprep.subr.mxu0 0.0
        %764 = vmatpush1.msra.mxu0 0.0
        %765 = vmatprep.subr.mxu0 0.0
        %766 = vmatpush1.msra.mxu0 0.0
        %767 = vmatprep.subr.mxu0 0.0
        %768 = vmatpush1.msra.mxu0 0.0
        %769 = vmatprep.subr.mxu0 0.0
        %770 = vmatpush1.msra.mxu0 0.0
        %771 = vmatprep.subr.mxu0 0.0
        %772 = vmatpush1.msra.mxu0 0.0
        %773 = vmatprep.subr.mxu0 0.0
        %774 = vmatpush1.msra.mxu0 0.0
        %775 = vmatprep.subr.mxu0 0.0
        %776 = vmatpush1.msra.mxu0 0.0
        %777 = vmatprep.subr.mxu0 0.0
        %778 = vmatpush1.msra.mxu0 0.0
        %779 = vmatprep.subr.mxu0 0.0
        %780 = vmatpush1.msra.mxu0 0.0
        %781 = vmatprep.subr.mxu0 0.0
        %782 = vmatpush1.msra.mxu0 0.0
        %783 = vmatprep.mubr.f32.mxu0 0.0
        %784 = vmatmul.mubr.f32.gmra.mrb[0].mxu0 %v622
        %v785 = vpop.f32.mrb[0].mxu0
        %v786 = vadd.f32 %v600, %v785
        %v787 = vpop.f32.mrb[0].mxu0
        %v788 = vadd.f32 %v602, %v787
        %789 = vmatprep.mubr.f32.mxu0 0.0
        %790 = vmatmul.mubr.f32.gmra.mrb[0].mxu0 %v624
        %v791 = vpop.f32.mrb[0].mxu0
        %v792 = vadd.f32 %v606, %v791
        %v793 = vpop.f32.mrb[0].mxu0
        %v794 = vadd.f32 %v608, %v793
        %795 = vmatprep.mubr.f32.mxu0 0.0
        %796 = vmatmul.mubr.f32.gmra.mrb[0].mxu0 %v626
        %v797 = vpop.f32.mrb[0].mxu0
        %v798 = vadd.f32 %v612, %v797
        %v799 = vpop.f32.mrb[0].mxu0
        %v800 = vadd.f32 %v614, %v799
        %801 = vmatprep.mubr.f32.mxu0 0.0
        %802 = vmatmul.mubr.f32.gmra.mrb[0].mxu0 %v628
        %v803 = vpop.f32.mrb[0].mxu0
        %v804 = vadd.f32 %v618, %v803
        %v805 = vpop.f32.mrb[0].mxu0
        %v806 = vadd.f32 %v620, %v805
        %807 = vdwg.mxu0
        %808 = vrot.lane.b32.xlu0 %v419, 112
        %v809 = vpop.permute.xlu0 %808
        %810 = vrot.lane.b32.xlu0 %v420, 112
        %v811 = vpop.permute.xlu0 %810
        %812 = vrot.lane.b32.xlu0 %v421, 112
        %v813 = vpop.permute.xlu0 %812
        %814 = vrot.lane.b32.xlu0 %v422, 112
        %v815 = vpop.permute.xlu0 %814
        %v816 = vsel %vm435, %v809, 0
        %v818 = vsel %vm435, %v811, 0
        %v820 = vsel %vm435, %v813, 0
        %v822 = vsel %vm435, %v815, 0
        %824 = vmatprep.subr.mxu0 %v395
        %825 = vmatpush1.msra.mxu0 %v394
        %826 = vmatprep.subr.mxu0 0.0
        %827 = vmatpush1.msra.mxu0 0.0
        %828 = vmatprep.subr.mxu0 0.0
        %829 = vmatpush1.msra.mxu0 0.0
        %830 = vmatprep.subr.mxu0 0.0
        %831 = vmatpush1.msra.mxu0 0.0
        %832 = vmatprep.subr.mxu0 0.0
        %833 = vmatpush1.msra.mxu0 0.0
        %834 = vmatprep.subr.mxu0 0.0
        %835 = vmatpush1.msra.mxu0 0.0
        %836 = vmatprep.subr.mxu0 0.0
        %837 = vmatpush1.msra.mxu0 0.0
        %838 = vmatprep.subr.mxu0 0.0
        %839 = vmatpush1.msra.mxu0 0.0
        %840 = vmatprep.subr.mxu0 0.0
        %841 = vmatpush1.msra.mxu0 0.0
        %842 = vmatprep.subr.mxu0 0.0
        %843 = vmatpush1.msra.mxu0 0.0
        %844 = vmatprep.subr.mxu0 0.0
        %845 = vmatpush1.msra.mxu0 0.0
        %846 = vmatprep.subr.mxu0 0.0
        %847 = vmatpush1.msra.mxu0 0.0
        %848 = vmatprep.subr.mxu0 0.0
        %849 = vmatpush1.msra.mxu0 0.0
        %850 = vmatprep.subr.mxu0 0.0
        %851 = vmatpush1.msra.mxu0 0.0
        %852 = vmatprep.subr.mxu0 0.0
        %853 = vmatpush1.msra.mxu0 0.0
        %854 = vmatprep.subr.mxu0 0.0
        %855 = vmatpush1.msra.mxu0 0.0
        %856 = vmatprep.subr.mxu0 0.0
        %857 = vmatpush1.msra.mxu0 0.0
        %858 = vmatprep.subr.mxu0 0.0
        %859 = vmatpush1.msra.mxu0 0.0
        %860 = vmatprep.subr.mxu0 0.0
        %861 = vmatpush1.msra.mxu0 0.0
        %862 = vmatprep.subr.mxu0 0.0
        %863 = vmatpush1.msra.mxu0 0.0
        %864 = vmatprep.subr.mxu0 0.0
        %865 = vmatpush1.msra.mxu0 0.0
        %866 = vmatprep.subr.mxu0 0.0
        %867 = vmatpush1.msra.mxu0 0.0
        %868 = vmatprep.subr.mxu0 0.0
        %869 = vmatpush1.msra.mxu0 0.0
        %870 = vmatprep.subr.mxu0 0.0
        %871 = vmatpush1.msra.mxu0 0.0
        %872 = vmatprep.subr.mxu0 0.0
        %873 = vmatpush1.msra.mxu0 0.0
        %874 = vmatprep.subr.mxu0 0.0
        %875 = vmatpush1.msra.mxu0 0.0
        %876 = vmatprep.subr.mxu0 0.0
        %877 = vmatpush1.msra.mxu0 0.0
        %878 = vmatprep.subr.mxu0 0.0
        %879 = vmatpush1.msra.mxu0 0.0
        %880 = vmatprep.subr.mxu0 0.0
        %881 = vmatpush1.msra.mxu0 0.0
        %882 = vmatprep.subr.mxu0 0.0
        %883 = vmatpush1.msra.mxu0 0.0
        %884 = vmatprep.subr.mxu0 0.0
        %885 = vmatpush1.msra.mxu0 0.0
        %886 = vmatprep.subr.mxu0 0.0
        %887 = vmatpush1.msra.mxu0 0.0
        %888 = vmatprep.mubr.f32.mxu0 0.0
        %889 = vmatmul.mubr.f32.gmra.mrb[0].mxu0 %v816
        %v890 = vpop.f32.mrb[0].mxu0
        %v891 = vadd.f32 0.0, %v890
        %v892 = vpop.f32.mrb[0].mxu0
        %v893 = vadd.f32 0.0, %v892
        %894 = vmatprep.mubr.f32.mxu0 0.0
        %895 = vmatmul.mubr.f32.gmra.mrb[0].mxu0 %v818
        %v896 = vpop.f32.mrb[0].mxu0
        %v897 = vadd.f32 0.0, %v896
        %v898 = vpop.f32.mrb[0].mxu0
        %v899 = vadd.f32 0.0, %v898
        %900 = vmatprep.mubr.f32.mxu0 0.0
        %901 = vmatmul.mubr.f32.gmra.mrb[0].mxu0 %v820
        %v902 = vpop.f32.mrb[0].mxu0
        %v903 = vadd.f32 0.0, %v902
        %v904 = vpop.f32.mrb[0].mxu0
        %v905 = vadd.f32 0.0, %v904
        %906 = vmatprep.mubr.f32.mxu0 0.0
        %907 = vmatmul.mubr.f32.gmra.mrb[0].mxu0 %v822
        %v908 = vpop.f32.mrb[0].mxu0
        %v909 = vadd.f32 0.0, %v908
        %v910 = vpop.f32.mrb[0].mxu0
        %v911 = vadd.f32 0.0, %v910
        %912 = vdwg.mxu0
        %913 = vmatprep.subr.mxu0 %v397
        %914 = vmatpush1.msra.mxu0 %v396
        %915 = vmatprep.subr.mxu0 0.0
        %916 = vmatpush1.msra.mxu0 0.0
        %917 = vmatprep.subr.mxu0 0.0
        %918 = vmatpush1.msra.mxu0 0.0
        %919 = vmatprep.subr.mxu0 0.0
        %920 = vmatpush1.msra.mxu0 0.0
        %921 = vmatprep.subr.mxu0 0.0
        %922 = vmatpush1.msra.mxu0 0.0
        %923 = vmatprep.subr.mxu0 0.0
        %924 = vmatpush1.msra.mxu0 0.0
        %925 = vmatprep.subr.mxu0 0.0
        %926 = vmatpush1.msra.mxu0 0.0
        %927 = vmatprep.subr.mxu0 0.0
        %928 = vmatpush1.msra.mxu0 0.0
        %929 = vmatprep.subr.mxu0 0.0
        %930 = vmatpush1.msra.mxu0 0.0
        %931 = vmatprep.subr.mxu0 0.0
        %932 = vmatpush1.msra.mxu0 0.0
        %933 = vmatprep.subr.mxu0 0.0
        %934 = vmatpush1.msra.mxu0 0.0
        %935 = vmatprep.subr.mxu0 0.0
        %936 = vmatpush1.msra.mxu0 0.0
        %937 = vmatprep.subr.mxu0 0.0
        %938 = vmatpush1.msra.mxu0 0.0
        %939 = vmatprep.subr.mxu0 0.0
        %940 = vmatpush1.msra.mxu0 0.0
        %941 = vmatprep.subr.mxu0 0.0
        %942 = vmatpush1.msra.mxu0 0.0
        %943 = vmatprep.subr.mxu0 0.0
        %944 = vmatpush1.msra.mxu0 0.0
        %945 = vmatprep.subr.mxu0 0.0
        %946 = vmatpush1.msra.mxu0 0.0
        %947 = vmatprep.subr.mxu0 0.0
        %948 = vmatpush1.msra.mxu0 0.0
        %949 = vmatprep.subr.mxu0 0.0
        %950 = vmatpush1.msra.mxu0 0.0
        %951 = vmatprep.subr.mxu0 0.0
        %952 = vmatpush1.msra.mxu0 0.0
        %953 = vmatprep.subr.mxu0 0.0
        %954 = vmatpush1.msra.mxu0 0.0
        %955 = vmatprep.subr.mxu0 0.0
        %956 = vmatpush1.msra.mxu0 0.0
        %957 = vmatprep.subr.mxu0 0.0
        %958 = vmatpush1.msra.mxu0 0.0
        %959 = vmatprep.subr.mxu0 0.0
        %960 = vmatpush1.msra.mxu0 0.0
        %961 = vmatprep.subr.mxu0 0.0
        %962 = vmatpush1.msra.mxu0 0.0
        %963 = vmatprep.subr.mxu0 0.0
        %964 = vmatpush1.msra.mxu0 0.0
        %965 = vmatprep.subr.mxu0 0.0
        %966 = vmatpush1.msra.mxu0 0.0
        %967 = vmatprep.subr.mxu0 0.0
        %968 = vmatpush1.msra.mxu0 0.0
        %969 = vmatprep.subr.mxu0 0.0
        %970 = vmatpush1.msra.mxu0 0.0
        %971 = vmatprep.subr.mxu0 0.0
        %972 = vmatpush1.msra.mxu0 0.0
        %973 = vmatprep.subr.mxu0 0.0
        %974 = vmatpush1.msra.mxu0 0.0
        %975 = vmatprep.subr.mxu0 0.0
        %976 = vmatpush1.msra.mxu0 0.0
        %977 = vmatprep.mubr.f32.mxu0 0.0
        %978 = vmatmul.mubr.f32.gmra.mrb[0].mxu0 %v816
        %v979 = vpop.f32.mrb[0].mxu0
        %v980 = vadd.f32 0.0, %v979
        %v981 = vpop.f32.mrb[0].mxu0
        %v982 = vadd.f32 0.0, %v981
        %983 = vmatprep.mubr.f32.mxu0 0.0
        %984 = vmatmul.mubr.f32.gmra.mrb[0].mxu0 %v818
        %v985 = vpop.f32.mrb[0].mxu0
        %v986 = vadd.f32 0.0, %v985
        %v987 = vpop.f32.mrb[0].mxu0
        %v988 = vadd.f32 0.0, %v987
        %989 = vmatprep.mubr.f32.mxu0 0.0
        %990 = vmatmul.mubr.f32.gmra.mrb[0].mxu0 %v820
        %v991 = vpop.f32.mrb[0].mxu0
        %v992 = vadd.f32 0.0, %v991
        %v993 = vpop.f32.mrb[0].mxu0
        %v994 = vadd.f32 0.0, %v993
        %995 = vmatprep.mubr.f32.mxu0 0.0
        %996 = vmatmul.mubr.f32.gmra.mrb[0].mxu0 %v822
        %v997 = vpop.f32.mrb[0].mxu0
        %v998 = vadd.f32 0.0, %v997
        %v999 = vpop.f32.mrb[0].mxu0
        %v1000 = vadd.f32 0.0, %v999
        %1001 = vdwg.mxu0
        %v1002 = vadd.f32 %v697, %v891
        %v1003 = vadd.f32 %v699, %v893
        %v1004 = vadd.f32 %v786, %v980
        %v1005 = vadd.f32 %v788, %v982
        %v1006 = vadd.f32 %v703, %v897
        %v1007 = vadd.f32 %v705, %v899
        %v1008 = vadd.f32 %v792, %v986
        %v1009 = vadd.f32 %v794, %v988
        %v1010 = vadd.f32 %v709, %v903
        %v1011 = vadd.f32 %v711, %v905
        %v1012 = vadd.f32 %v798, %v992
        %v1013 = vadd.f32 %v800, %v994
        %v1014 = vadd.f32 %v715, %v909
        %v1015 = vadd.f32 %v717, %v911
        %v1016 = vadd.f32 %v804, %v998
        %v1017 = vadd.f32 %v806, %v1000
        %1018 = vrot.lane.b32.xlu0 %v419, 104
        %v1019 = vpop.permute.xlu0 %1018
        %1020 = vrot.lane.b32.xlu0 %v420, 104
        %v1021 = vpop.permute.xlu0 %1020
        %1022 = vrot.lane.b32.xlu0 %v421, 104
        %v1023 = vpop.permute.xlu0 %1022
        %1024 = vrot.lane.b32.xlu0 %v422, 104
        %v1025 = vpop.permute.xlu0 %1024
        %v1026 = vsel %vm435, %v1019, 0
        %v1028 = vsel %vm435, %v1021, 0
        %v1030 = vsel %vm435, %v1023, 0
        %v1032 = vsel %vm435, %v1025, 0
        %1034 = vmatprep.subr.mxu0 %v416
        %1035 = vmatpush1.msra.mxu0 %v415
        %1036 = vmatprep.subr.mxu0 0.0
        %1037 = vmatpush1.msra.mxu0 0.0
        %1038 = vmatprep.subr.mxu0 0.0
        %1039 = vmatpush1.msra.mxu0 0.0
        %1040 = vmatprep.subr.mxu0 0.0
        %1041 = vmatpush1.msra.mxu0 0.0
        %1042 = vmatprep.subr.mxu0 0.0
        %1043 = vmatpush1.msra.mxu0 0.0
        %1044 = vmatprep.subr.mxu0 0.0
        %1045 = vmatpush1.msra.mxu0 0.0
        %1046 = vmatprep.subr.mxu0 0.0
        %1047 = vmatpush1.msra.mxu0 0.0
        %1048 = vmatprep.subr.mxu0 0.0
        %1049 = vmatpush1.msra.mxu0 0.0
        %1050 = vmatprep.subr.mxu0 0.0
        %1051 = vmatpush1.msra.mxu0 0.0
        %1052 = vmatprep.subr.mxu0 0.0
        %1053 = vmatpush1.msra.mxu0 0.0
        %1054 = vmatprep.subr.mxu0 0.0
        %1055 = vmatpush1.msra.mxu0 0.0
        %1056 = vmatprep.subr.mxu0 0.0
        %1057 = vmatpush1.msra.mxu0 0.0
        %1058 = vmatprep.subr.mxu0 0.0
        %1059 = vmatpush1.msra.mxu0 0.0
        %1060 = vmatprep.subr.mxu0 0.0
        %1061 = vmatpush1.msra.mxu0 0.0
        %1062 = vmatprep.subr.mxu0 0.0
        %1063 = vmatpush1.msra.mxu0 0.0
        %1064 = vmatprep.subr.mxu0 0.0
        %1065 = vmatpush1.msra.mxu0 0.0
        %1066 = vmatprep.subr.mxu0 0.0
        %1067 = vmatpush1.msra.mxu0 0.0
        %1068 = vmatprep.subr.mxu0 0.0
        %1069 = vmatpush1.msra.mxu0 0.0
        %1070 = vmatprep.subr.mxu0 0.0
        %1071 = vmatpush1.msra.mxu0 0.0
        %1072 = vmatprep.subr.mxu0 0.0
        %1073 = vmatpush1.msra.mxu0 0.0
        %1074 = vmatprep.subr.mxu0 0.0
        %1075 = vmatpush1.msra.mxu0 0.0
        %1076 = vmatprep.subr.mxu0 0.0
        %1077 = vmatpush1.msra.mxu0 0.0
        %1078 = vmatprep.subr.mxu0 0.0
        %1079 = vmatpush1.msra.mxu0 0.0
        %1080 = vmatprep.subr.mxu0 0.0
        %1081 = vmatpush1.msra.mxu0 0.0
        %1082 = vmatprep.subr.mxu0 0.0
        %1083 = vmatpush1.msra.mxu0 0.0
        %1084 = vmatprep.subr.mxu0 0.0
        %1085 = vmatpush1.msra.mxu0 0.0
        %1086 = vmatprep.subr.mxu0 0.0
        %1087 = vmatpush1.msra.mxu0 0.0
        %1088 = vmatprep.subr.mxu0 0.0
        %1089 = vmatpush1.msra.mxu0 0.0
        %1090 = vmatprep.subr.mxu0 0.0
        %1091 = vmatpush1.msra.mxu0 0.0
        %1092 = vmatprep.subr.mxu0 0.0
        %1093 = vmatpush1.msra.mxu0 0.0
        %1094 = vmatprep.subr.mxu0 0.0
        %1095 = vmatpush1.msra.mxu0 0.0
        %1096 = vmatprep.subr.mxu0 0.0
        %1097 = vmatpush1.msra.mxu0 0.0
        %1098 = vmatprep.mubr.f32.mxu0 0.0
        %1099 = vmatmul.mubr.f32.gmra.mrb[0].mxu0 %v1026
        %v1100 = vpop.f32.mrb[0].mxu0
        %v1101 = vadd.f32 0.0, %v1100
        %v1102 = vpop.f32.mrb[0].mxu0
        %v1103 = vadd.f32 0.0, %v1102
        %1104 = vmatprep.mubr.f32.mxu0 0.0
        %1105 = vmatmul.mubr.f32.gmra.mrb[0].mxu0 %v1028
        %v1106 = vpop.f32.mrb[0].mxu0
        %v1107 = vadd.f32 0.0, %v1106
        %v1108 = vpop.f32.mrb[0].mxu0
        %v1109 = vadd.f32 0.0, %v1108
        %1110 = vmatprep.mubr.f32.mxu0 0.0
        %1111 = vmatmul.mubr.f32.gmra.mrb[0].mxu0 %v1030
        %v1112 = vpop.f32.mrb[0].mxu0
        %v1113 = vadd.f32 0.0, %v1112
        %v1114 = vpop.f32.mrb[0].mxu0
        %v1115 = vadd.f32 0.0, %v1114
        %1116 = vmatprep.mubr.f32.mxu0 0.0
        %1117 = vmatmul.mubr.f32.gmra.mrb[0].mxu0 %v1032
        %v1118 = vpop.f32.mrb[0].mxu0
        %v1119 = vadd.f32 0.0, %v1118
        %v1120 = vpop.f32.mrb[0].mxu0
        %v1121 = vadd.f32 0.0, %v1120
        %1122 = vdwg.mxu0
        %1123 = vmatprep.subr.mxu0 %v418
        %1124 = vmatpush1.msra.mxu0 %v417
        %1125 = vmatprep.subr.mxu0 0.0
        %1126 = vmatpush1.msra.mxu0 0.0
        %1127 = vmatprep.subr.mxu0 0.0
        %1128 = vmatpush1.msra.mxu0 0.0
        %1129 = vmatprep.subr.mxu0 0.0
        %1130 = vmatpush1.msra.mxu0 0.0
        %1131 = vmatprep.subr.mxu0 0.0
        %1132 = vmatpush1.msra.mxu0 0.0
        %1133 = vmatprep.subr.mxu0 0.0
        %1134 = vmatpush1.msra.mxu0 0.0
        %1135 = vmatprep.subr.mxu0 0.0
        %1136 = vmatpush1.msra.mxu0 0.0
        %1137 = vmatprep.subr.mxu0 0.0
        %1138 = vmatpush1.msra.mxu0 0.0
        %1139 = vmatprep.subr.mxu0 0.0
        %1140 = vmatpush1.msra.mxu0 0.0
        %1141 = vmatprep.subr.mxu0 0.0
        %1142 = vmatpush1.msra.mxu0 0.0
        %1143 = vmatprep.subr.mxu0 0.0
        %1144 = vmatpush1.msra.mxu0 0.0
        %1145 = vmatprep.subr.mxu0 0.0
        %1146 = vmatpush1.msra.mxu0 0.0
        %1147 = vmatprep.subr.mxu0 0.0
        %1148 = vmatpush1.msra.mxu0 0.0
        %1149 = vmatprep.subr.mxu0 0.0
        %1150 = vmatpush1.msra.mxu0 0.0
        %1151 = vmatprep.subr.mxu0 0.0
        %1152 = vmatpush1.msra.mxu0 0.0
        %1153 = vmatprep.subr.mxu0 0.0
        %1154 = vmatpush1.msra.mxu0 0.0
        %1155 = vmatprep.subr.mxu0 0.0
        %1156 = vmatpush1.msra.mxu0 0.0
        %1157 = vmatprep.subr.mxu0 0.0
        %1158 = vmatpush1.msra.mxu0 0.0
        %1159 = vmatprep.subr.mxu0 0.0
        %1160 = vmatpush1.msra.mxu0 0.0
        %1161 = vmatprep.subr.mxu0 0.0
        %1162 = vmatpush1.msra.mxu0 0.0
        %1163 = vmatprep.subr.mxu0 0.0
        %1164 = vmatpush1.msra.mxu0 0.0
        %1165 = vmatprep.subr.mxu0 0.0
        %1166 = vmatpush1.msra.mxu0 0.0
        %1167 = vmatprep.subr.mxu0 0.0
        %1168 = vmatpush1.msra.mxu0 0.0
        %1169 = vmatprep.subr.mxu0 0.0
        %1170 = vmatpush1.msra.mxu0 0.0
        %1171 = vmatprep.subr.mxu0 0.0
        %1172 = vmatpush1.msra.mxu0 0.0
        %1173 = vmatprep.subr.mxu0 0.0
        %1174 = vmatpush1.msra.mxu0 0.0
        %1175 = vmatprep.subr.mxu0 0.0
        %1176 = vmatpush1.msra.mxu0 0.0
        %1177 = vmatprep.subr.mxu0 0.0
        %1178 = vmatpush1.msra.mxu0 0.0
        %1179 = vmatprep.subr.mxu0 0.0
        %1180 = vmatpush1.msra.mxu0 0.0
        %1181 = vmatprep.subr.mxu0 0.0
        %1182 = vmatpush1.msra.mxu0 0.0
        %1183 = vmatprep.subr.mxu0 0.0
        %1184 = vmatpush1.msra.mxu0 0.0
        %1185 = vmatprep.subr.mxu0 0.0
        %1186 = vmatpush1.msra.mxu0 0.0
        %1187 = vmatprep.mubr.f32.mxu0 0.0
        %1188 = vmatmul.mubr.f32.gmra.mrb[0].mxu0 %v1026
        %v1189 = vpop.f32.mrb[0].mxu0
        %v1190 = vadd.f32 0.0, %v1189
        %v1191 = vpop.f32.mrb[0].mxu0
        %v1192 = vadd.f32 0.0, %v1191
        %1193 = vmatprep.mubr.f32.mxu0 0.0
        %1194 = vmatmul.mubr.f32.gmra.mrb[0].mxu0 %v1028
        %v1195 = vpop.f32.mrb[0].mxu0
        %v1196 = vadd.f32 0.0, %v1195
        %v1197 = vpop.f32.mrb[0].mxu0
        %v1198 = vadd.f32 0.0, %v1197
        %1199 = vmatprep.mubr.f32.mxu0 0.0
        %1200 = vmatmul.mubr.f32.gmra.mrb[0].mxu0 %v1030
        %v1201 = vpop.f32.mrb[0].mxu0
        %v1202 = vadd.f32 0.0, %v1201
        %v1203 = vpop.f32.mrb[0].mxu0
        %v1204 = vadd.f32 0.0, %v1203
        %1205 = vmatprep.mubr.f32.mxu0 0.0
        %1206 = vmatmul.mubr.f32.gmra.mrb[0].mxu0 %v1032
        %v1207 = vpop.f32.mrb[0].mxu0
        %v1208 = vadd.f32 0.0, %v1207
        %v1209 = vpop.f32.mrb[0].mxu0
        %v1210 = vadd.f32 0.0, %v1209
        %1211 = vdwg.mxu0
        %v1212 = vadd.f32 %v1002, %v1101
        %v1213 = vadd.f32 %v1003, %v1103
        %v1214 = vadd.f32 %v1004, %v1190
        %v1215 = vadd.f32 %v1005, %v1192
        %v1216 = vadd.f32 %v1006, %v1107
        %v1217 = vadd.f32 %v1007, %v1109
        %v1218 = vadd.f32 %v1008, %v1196
        %v1219 = vadd.f32 %v1009, %v1198
        %v1220 = vadd.f32 %v1010, %v1113
        %v1221 = vadd.f32 %v1011, %v1115
        %v1222 = vadd.f32 %v1012, %v1202
        %v1223 = vadd.f32 %v1013, %v1204
        %v1224 = vadd.f32 %v1014, %v1119
        %v1225 = vadd.f32 %v1015, %v1121
        %v1226 = vadd.f32 %v1016, %v1208
        %v1227 = vadd.f32 %v1017, %v1210
        %v1228 = vpack.c.bf16 %v1216, %v1212
        %v1229 = vpack.c.bf16 %v1217, %v1213
        %v1230 = vpack.c.bf16 %v1218, %v1214
        %v1231 = vpack.c.bf16 %v1219, %v1215
        %v1232 = vpack.c.bf16 %v1224, %v1220
        %v1233 = vpack.c.bf16 %v1225, %v1221
        %v1234 = vpack.c.bf16 %v1226, %v1222
        %v1235 = vpack.c.bf16 %v1227, %v1223
        %s1236 = smul.u32 %s20, 8
        %s1237 = smul.addr %s1236, 8
        %s1238 = scalar_lea.vmem [#allocation2], %s1237
        %1239 = vst [vmem:[%s1238] sm:$0xff] %v1228
        %1240 = vst [vmem:[%s1238 + $0x8] sm:$0xff] %v1229
        %1241 = vst [vmem:[%s1238 + $0x10] sm:$0xff] %v1230
        %1242 = vst [vmem:[%s1238 + $0x18] sm:$0xff] %v1231
        %1243 = vst [vmem:[%s1238 + $0x20] sm:$0xff] %v1232
        %1244 = vst [vmem:[%s1238 + $0x28] sm:$0xff] %v1233
        %1245 = vst [vmem:[%s1238 + $0x30] sm:$0xff] %v1234
        %1246 = vst [vmem:[%s1238 + $0x38] sm:$0xff] %v1235
        %s1247 = smul.u32 %s20, 512
        %v1248 = vstv %s1247
        %v1249 = vadd.s32 %v1248, %v250
        %v1250 = vadd.s32 %v1248, %v251
        %v1251 = vadd.s32 %v1248, %v252
        %v1252 = vadd.s32 %v1248, %v253
        %vm1253 = vcmp.lt.s32.totalorder %v1249, 512
        %vm1254 = vcmp.lt.s32.totalorder %v1250, 512
        %vm1255 = vcmp.lt.s32.totalorder %v1251, 512
        %vm1256 = vcmp.lt.s32.totalorder %v1252, 512
        %v1257 = vsel %vm1253, %v1212, 0.0
        %v1258 = vsel %vm1254, %v1213, 0.0
        %v1259 = vsel %vm1255, %v1214, 0.0
        %v1260 = vsel %vm1256, %v1215, 0.0
        %v1261 = vsel %vm1253, %v1216, 0.0
        %v1262 = vsel %vm1254, %v1217, 0.0
        %v1263 = vsel %vm1255, %v1218, 0.0
        %v1264 = vsel %vm1256, %v1219, 0.0
        %v1265 = vsel %vm1253, %v1220, 0.0
        %v1266 = vsel %vm1254, %v1221, 0.0
        %v1267 = vsel %vm1255, %v1222, 0.0
        %v1268 = vsel %vm1256, %v1223, 0.0
        %v1269 = vsel %vm1253, %v1224, 0.0
        %v1270 = vsel %vm1254, %v1225, 0.0
        %v1271 = vsel %vm1255, %v1226, 0.0
        %v1272 = vsel %vm1256, %v1227, 0.0
        %v1273 = vld [vmem:[#allocation3] sm:$0xff]
        %v1274 = vld [vmem:[#allocation3 + $0x8] sm:$0xff]
        %v1275 = vld [vmem:[#allocation3 + $0x10] sm:$0xff]
        %v1276 = vld [vmem:[#allocation3 + $0x18] sm:$0xff]
        %v1277 = vadd.f32 %v1257, %v1258
        %v1278 = vadd.f32 %v1277, %v1259
        %v1279 = vadd.f32 %v1278, %v1260
        %1280 = vadd.xlane.f32.xlu0 %v1279
        %v1281 = vpop.xlane.xlu0 %1280
        %v1282 = vadd.f32 %v1261, %v1262
        %v1283 = vadd.f32 %v1282, %v1263
        %v1284 = vadd.f32 %v1283, %v1264
        %1285 = vadd.xlane.f32.xlu0 %v1284
        %v1286 = vpop.xlane.xlu0 %1285
        %v1287 = vadd.f32 %v1265, %v1266
        %v1288 = vadd.f32 %v1287, %v1267
        %v1289 = vadd.f32 %v1288, %v1268
        %1290 = vadd.xlane.f32.xlu0 %v1289
        %v1291 = vpop.xlane.xlu0 %1290
        %v1292 = vadd.f32 %v1269, %v1270
        %v1293 = vadd.f32 %v1292, %v1271
        %v1294 = vadd.f32 %v1293, %v1272
        %1295 = vadd.xlane.f32.xlu0 %v1294
        %v1296 = vpop.xlane.xlu0 %1295
        %v1297 = vadd.f32 %v1273, %v1281
        %v1298 = vadd.f32 %v1274, %v1286
        %v1299 = vadd.f32 %v1275, %v1291
        %v1300 = vadd.f32 %v1276, %v1296
        %vm1301 = vcmask 7168
        %1302 = vst.msk [vmem:[#allocation3] sm:$0xff] %vm1301, %v1297
        %1303 = vst.msk [vmem:[#allocation3 + $0x8] sm:$0xff] %vm1301, %v1298
        %1304 = vst.msk [vmem:[#allocation3 + $0x10] sm:$0xff] %vm1301, %v1299
        %1305 = vst.msk [vmem:[#allocation3 + $0x18] sm:$0xff] %vm1301, %v1300
        %v1306 = vld [vmem:[#allocation4] sm:$0xff]
        %v1307 = vld [vmem:[#allocation4 + $0x8] sm:$0xff]
        %v1308 = vld [vmem:[#allocation4 + $0x10] sm:$0xff]
        %v1309 = vld [vmem:[#allocation4 + $0x18] sm:$0xff]
        %v1310 = vmul.f32 %v1257, %v1257
        %v1311 = vmul.f32 %v1258, %v1258
        %v1312 = vmul.f32 %v1259, %v1259
        %v1313 = vmul.f32 %v1260, %v1260
        %v1314 = vmul.f32 %v1261, %v1261
        %v1315 = vmul.f32 %v1262, %v1262
        %v1316 = vmul.f32 %v1263, %v1263
        %v1317 = vmul.f32 %v1264, %v1264
        %v1318 = vmul.f32 %v1265, %v1265
        %v1319 = vmul.f32 %v1266, %v1266
        %v1320 = vmul.f32 %v1267, %v1267
        %v1321 = vmul.f32 %v1268, %v1268
        %v1322 = vmul.f32 %v1269, %v1269
        %v1323 = vmul.f32 %v1270, %v1270
        %v1324 = vmul.f32 %v1271, %v1271
        %v1325 = vmul.f32 %v1272, %v1272
        %v1326 = vadd.f32 %v1310, %v1311
        %v1327 = vadd.f32 %v1326, %v1312
        %v1328 = vadd.f32 %v1327, %v1313
        %1329 = vadd.xlane.f32.xlu0 %v1328
        %v1330 = vpop.xlane.xlu0 %1329
        %v1331 = vadd.f32 %v1314, %v1315
        %v1332 = vadd.f32 %v1331, %v1316
        %v1333 = vadd.f32 %v1332, %v1317
        %1334 = vadd.xlane.f32.xlu0 %v1333
        %v1335 = vpop.xlane.xlu0 %1334
        %v1336 = vadd.f32 %v1318, %v1319
        %v1337 = vadd.f32 %v1336, %v1320
        %v1338 = vadd.f32 %v1337, %v1321
        %1339 = vadd.xlane.f32.xlu0 %v1338
        %v1340 = vpop.xlane.xlu0 %1339
        %v1341 = vadd.f32 %v1322, %v1323
        %v1342 = vadd.f32 %v1341, %v1324
        %v1343 = vadd.f32 %v1342, %v1325
        %1344 = vadd.xlane.f32.xlu0 %v1343
        %v1345 = vpop.xlane.xlu0 %1344
        %v1346 = vadd.f32 %v1306, %v1330
        %v1347 = vadd.f32 %v1307, %v1335
        %v1348 = vadd.f32 %v1308, %v1340
        %v1349 = vadd.f32 %v1309, %v1345
        %1350 = vst.msk [vmem:[#allocation4] sm:$0xff] %vm1301, %v1346
        %1351 = vst.msk [vmem:[#allocation4 + $0x8] sm:$0xff] %vm1301, %v1347
        %1352 = vst.msk [vmem:[#allocation4 + $0x10] sm:$0xff] %vm1301, %v1348
        %1353 = vst.msk [vmem:[#allocation4 + $0x18] sm:$0xff] %vm1301, %v1349
      $region40: #{deconv_bn_act.1} parent=35 // pred_fallthru
        _
      %p1354 = scmp.eq.s32.totalorder %s19, 1
      // Predicated region
      $region45: #{deconv_bn_act.1} parent=35 // pred_check
        %p1355 = pneg %p1354
      $region46: #{deconv_bn_act.1} parent=35 // pred_check_branch
        %1357 = sbr.rel (%p1355) target = $region48
      $region47: #{deconv_bn_act.1} parent=35 // pred_region
        %p1358 = scmp.eq.s32.totalorder %s20, 0
        // Predicated region
        $region49: #{deconv_bn_act.1} parent=47 // pred_check
          %p1359 = pneg %p1358
        $region50: #{deconv_bn_act.1} parent=47 // pred_check_branch
          %1361 = sbr.rel (%p1359) target = $region52
        $region51: #{deconv_bn_act.1} parent=47 // pred_region
          %v1362 = vld [vmem:[#allocation3] sm:$0xff]
          %v1363 = vld [vmem:[#allocation3 + $0x8] sm:$0xff]
          %v1364 = vadd.f32 %v1362, %v1363
          %v1365 = vld [vmem:[#allocation3 + $0x10] sm:$0xff]
          %v1366 = vadd.f32 %v1364, %v1365
          %v1367 = vld [vmem:[#allocation3 + $0x18] sm:$0xff]
          %v1368 = vadd.f32 %v1366, %v1367
          %v1369 = vld [vmem:[#allocation4] sm:$0xff]
          %v1370 = vld [vmem:[#allocation4 + $0x8] sm:$0xff]
          %v1371 = vadd.f32 %v1369, %v1370
          %v1372 = vld [vmem:[#allocation4 + $0x10] sm:$0xff]
          %v1373 = vadd.f32 %v1371, %v1372
          %v1374 = vld [vmem:[#allocation4 + $0x18] sm:$0xff]
          %v1375 = vadd.f32 %v1373, %v1374
          %v1376 = vmul.f32 %v1368, 0.00048828125
          %v1377 = vmul.f32 %v1375, 0.00048828125
          %v1378 = vmul.f32 %v1376, %v1376
          %v1379 = vsub.f32 %v1377, %v1378
          %v1380 = vmax.f32 %v1379, 0.0
          %v1381 = vld [vmem:[%s2] sm:$0xff]
          %v1382 = vadd.f32 %v1380, 1e-05
          %v1383 = vrsqrt.pop %v1382
          %v1384 = vmul.f32 %v1381, %v1383
          %v1385 = vld [vmem:[%s3] sm:$0xff]
          %v1386 = vmul.f32 %v1376, %v1384
          %v1387 = vsub.f32 %v1385, %v1386
          %vm1388 = vcmask 7168
          %1389 = vst.msk [vmem:[#allocation5] sm:$0xff] %vm1388, %v1384
          %1390 = vst.msk [vmem:[#allocation6] sm:$0xff] %vm1388, %v1387
          %1391 = vst.msk [vmem:[#allocation5 + $0x8] sm:$0xff] %vm1388, %v1384
          %1392 = vst.msk [vmem:[#allocation6 + $0x8] sm:$0xff] %vm1388, %v1387
          %1393 = vst.msk [vmem:[#allocation5 + $0x10] sm:$0xff] %vm1388, %v1384
          %1394 = vst.msk [vmem:[#allocation6 + $0x10] sm:$0xff] %vm1388, %v1387
          %1395 = vst.msk [vmem:[#allocation5 + $0x18] sm:$0xff] %vm1388, %v1384
          %1396 = vst.msk [vmem:[#allocation6 + $0x18] sm:$0xff] %vm1388, %v1387
        $region52: #{deconv_bn_act.1} parent=47 // pred_fallthru
          _
        %s1397 = smul.u32 %s20, 8
        %s1398 = smul.addr %s1397, 8
        %s1399 = scalar_lea.vmem [#allocation2], %s1398
        %v1400 = vld [vmem:[%s1399] sm:$0xff]
        %v1401 = vld [vmem:[%s1399 + $0x8] sm:$0xff]
        %v1402 = vld [vmem:[%s1399 + $0x10] sm:$0xff]
        %v1403 = vld [vmem:[%s1399 + $0x18] sm:$0xff]
        %v1404 = vld [vmem:[%s1399 + $0x20] sm:$0xff]
        %v1405 = vld [vmem:[%s1399 + $0x28] sm:$0xff]
        %v1406 = vld [vmem:[%s1399 + $0x30] sm:$0xff]
        %v1407 = vld [vmem:[%s1399 + $0x38] sm:$0xff]
        %v1408 = vunpack.c.l.bf16 %v1400
        %v1409 = vunpack.c.l.bf16 %v1401
        %v1410 = vunpack.c.l.bf16 %v1402
        %v1411 = vunpack.c.l.bf16 %v1403
        %v1412 = vunpack.c.h.bf16 %v1400
        %v1413 = vunpack.c.h.bf16 %v1401
        %v1414 = vunpack.c.h.bf16 %v1402
        %v1415 = vunpack.c.h.bf16 %v1403
        %v1416 = vunpack.c.l.bf16 %v1404
        %v1417 = vunpack.c.l.bf16 %v1405
        %v1418 = vunpack.c.l.bf16 %v1406
        %v1419 = vunpack.c.l.bf16 %v1407
        %v1420 = vunpack.c.h.bf16 %v1404
        %v1421 = vunpack.c.h.bf16 %v1405
        %v1422 = vunpack.c.h.bf16 %v1406
        %v1423 = vunpack.c.h.bf16 %v1407
        %v1424 = vld [vmem:[#allocation5] sm:$0xff]
        %v1425 = vld [vmem:[#allocation5 + $0x8] sm:$0xff]
        %v1426 = vld [vmem:[#allocation5 + $0x10] sm:$0xff]
        %v1427 = vld [vmem:[#allocation5 + $0x18] sm:$0xff]
        %1429 = vset.pattern.permute.xlu0 0
        %1430 = vperm.xlu0 %1429, %v1424
        %v1431 = vpop.permute.xlu0 %1430
        %1434 = vset.pattern.permute.xlu0 0
        %1435 = vperm.xlu0 %1434, %v1425
        %v1436 = vpop.permute.xlu0 %1435
        %1439 = vset.pattern.permute.xlu0 0
        %1440 = vperm.xlu0 %1439, %v1426
        %v1441 = vpop.permute.xlu0 %1440
        %1444 = vset.pattern.permute.xlu0 0
        %1445 = vperm.xlu0 %1444, %v1427
        %v1446 = vpop.permute.xlu0 %1445
        %v1448 = vmul.f32 %v1408, %v1431
        %v1449 = vmul.f32 %v1409, %v1431
        %v1450 = vmul.f32 %v1410, %v1431
        %v1451 = vmul.f32 %v1411, %v1431
        %v1452 = vmul.f32 %v1412, %v1436
        %v1453 = vmul.f32 %v1413, %v1436
        %v1454 = vmul.f32 %v1414, %v1436
        %v1455 = vmul.f32 %v1415, %v1436
        %v1456 = vmul.f32 %v1416, %v1441
        %v1457 = vmul.f32 %v1417, %v1441
        %v1458 = vmul.f32 %v1418, %v1441
        %v1459 = vmul.f32 %v1419, %v1441
        %v1460 = vmul.f32 %v1420, %v1446
        %v1461 = vmul.f32 %v1421, %v1446
        %v1462 = vmul.f32 %v1422, %v1446
        %v1463 = vmul.f32 %v1423, %v1446
        %v1464 = vld [vmem:[#allocation6] sm:$0xff]
        %v1465 = vld [vmem:[#allocation6 + $0x8] sm:$0xff]
        %v1466 = vld [vmem:[#allocation6 + $0x10] sm:$0xff]
        %v1467 = vld [vmem:[#allocation6 + $0x18] sm:$0xff]
        %1469 = vset.pattern.permute.xlu0 0
        %1470 = vperm.xlu0 %1469, %v1464
        %v1471 = vpop.permute.xlu0 %1470
        %1474 = vset.pattern.permute.xlu0 0
        %1475 = vperm.xlu0 %1474, %v1465
        %v1476 = vpop.permute.xlu0 %1475
        %1479 = vset.pattern.permute.xlu0 0
        %1480 = vperm.xlu0 %1479, %v1466
        %v1481 = vpop.permute.xlu0 %1480
        %1484 = vset.pattern.permute.xlu0 0
        %1485 = vperm.xlu0 %1484, %v1467
        %v1486 = vpop.permute.xlu0 %1485
        %v1488 = vadd.f32 %v1448, %v1471
        %v1489 = vadd.f32 %v1449, %v1471
        %v1490 = vadd.f32 %v1450, %v1471
        %v1491 = vadd.f32 %v1451, %v1471
        %v1492 = vadd.f32 %v1452, %v1476
        %v1493 = vadd.f32 %v1453, %v1476
        %v1494 = vadd.f32 %v1454, %v1476
        %v1495 = vadd.f32 %v1455, %v1476
        %v1496 = vadd.f32 %v1456, %v1481
        %v1497 = vadd.f32 %v1457, %v1481
        %v1498 = vadd.f32 %v1458, %v1481
        %v1499 = vadd.f32 %v1459, %v1481
        %v1500 = vadd.f32 %v1460, %v1486
        %v1501 = vadd.f32 %v1461, %v1486
        %v1502 = vadd.f32 %v1462, %v1486
        %v1503 = vadd.f32 %v1463, %v1486
        %v1504 = vmax.f32 %v1488, 0.0
        %v1505 = vmax.f32 %v1489, 0.0
        %v1506 = vmax.f32 %v1490, 0.0
        %v1507 = vmax.f32 %v1491, 0.0
        %v1508 = vmax.f32 %v1492, 0.0
        %v1509 = vmax.f32 %v1493, 0.0
        %v1510 = vmax.f32 %v1494, 0.0
        %v1511 = vmax.f32 %v1495, 0.0
        %v1512 = vmax.f32 %v1496, 0.0
        %v1513 = vmax.f32 %v1497, 0.0
        %v1514 = vmax.f32 %v1498, 0.0
        %v1515 = vmax.f32 %v1499, 0.0
        %v1516 = vmax.f32 %v1500, 0.0
        %v1517 = vmax.f32 %v1501, 0.0
        %v1518 = vmax.f32 %v1502, 0.0
        %v1519 = vmax.f32 %v1503, 0.0
        %v1520 = vpack.c.bf16 %v1508, %v1504
        %v1521 = vpack.c.bf16 %v1509, %v1505
        %v1522 = vpack.c.bf16 %v1510, %v1506
        %v1523 = vpack.c.bf16 %v1511, %v1507
        %v1524 = vpack.c.bf16 %v1516, %v1512
        %v1525 = vpack.c.bf16 %v1517, %v1513
        %v1526 = vpack.c.bf16 %v1518, %v1514
        %v1527 = vpack.c.bf16 %v1519, %v1515
        %v1536 = vunpack.c.l.b16 %v1520
        %v1537 = vunpack.c.l.b16 %v1521
        %v1538 = vunpack.c.l.b16 %v1522
        %v1539 = vunpack.c.l.b16 %v1523
        %v1540 = vunpack.c.h.b16 %v1520
        %v1541 = vunpack.c.h.b16 %v1521
        %v1542 = vunpack.c.h.b16 %v1522
        %v1543 = vunpack.c.h.b16 %v1523
        %v1544 = vunpack.c.l.b16 %v1524
        %v1545 = vunpack.c.l.b16 %v1525
        %v1546 = vunpack.c.l.b16 %v1526
        %v1547 = vunpack.c.l.b16 %v1527
        %v1548 = vunpack.c.h.b16 %v1524
        %v1549 = vunpack.c.h.b16 %v1525
        %v1550 = vunpack.c.h.b16 %v1526
        %v1551 = vunpack.c.h.b16 %v1527
        %v1552 = vpack.c.b16 %v1537, %v1536
        %v1553 = vpack.c.b16 %v1539, %v1538
        %v1554 = vpack.c.b16 %v1541, %v1540
        %v1555 = vpack.c.b16 %v1543, %v1542
        %v1556 = vpack.c.b16 %v1545, %v1544
        %v1557 = vpack.c.b16 %v1547, %v1546
        %v1558 = vpack.c.b16 %v1549, %v1548
        %v1559 = vpack.c.b16 %v1551, %v1550
        %1568 = vst [vmem:[%s229] sm:$0xff] %v1552
        %1569 = vst [vmem:[%s229 + $0x8] sm:$0xff] %v1553
        %1570 = vst [vmem:[%s229 + $0x10] sm:$0xff] %v1554
        %1571 = vst [vmem:[%s229 + $0x18] sm:$0xff] %v1555
        %1572 = vst [vmem:[%s229 + $0x20] sm:$0xff] %v1556
        %1573 = vst [vmem:[%s229 + $0x28] sm:$0xff] %v1557
        %1574 = vst [vmem:[%s229 + $0x30] sm:$0xff] %v1558
        %1575 = vst [vmem:[%s229 + $0x38] sm:$0xff] %v1559
      $region48: #{deconv_bn_act.1} parent=35 // pred_fallthru
        _
      %s1576 = smul.u32 %s20, %s19
      %s1577 = smul.u32 4, %s1576
      %p1578 = scmp.lt.s32.totalorder %s1577, 3
      %s1579 = scalar_select %p1578, %s1577, 3
      %s1580 = smul.addr %s1579, 4
      %s1581 = scalar_lea.vmem %s4, %s1580
      // Predicated region
      $region53: #{deconv_bn_act.1} parent=35 // pred_check
        %p1582 = pneg %p140
      $region54: #{deconv_bn_act.1} parent=35 // pred_check_branch
        %1584 = sbr.rel (%p1582) target = $region56
      $region55: #{deconv_bn_act.1} parent=35 // pred_region
        %s1585 = smul.u32 %s20, %s19
        %s1586 = smul.u32 4, %s1585
      $region56: #{deconv_bn_act.1} parent=35 // pred_fallthru
        _
    $region36: #{deconv_bn_act.1} parent=5 // pred_fallthru
      _
    %p1587 = scmp.le.s32.totalorder 2, %s10
    // Predicated region
    $region57: #{deconv_bn_act.1} parent=5 // pred_check
      %p1588 = pneg %p1587
    $region58: #{deconv_bn_act.1} parent=5 // pred_check_branch
      %1590 = sbr.rel (%p1588) target = $region60
    $region59: #{deconv_bn_act.1} parent=5 // pred_region
      %s1591 = ssub.s32 %s10, 2
      // Predicated region
      $region61: #{deconv_bn_act.1} parent=59 // pred_check
        %p1592 = pneg %p146
      $region62: #{deconv_bn_act.1} parent=59 // pred_check_branch
        %1594 = sbr.rel (%p1592) target = $region64
      $region63: #{deconv_bn_act.1} parent=59 // pred_region
        %s1595 = smul.u32 %s22, %s21
        %s1596 = smul.u32 4, %s1595
        %p1597 = scmp.lt.s32.totalorder %s1596, 3
        %s1598 = scalar_select %p1597, %s1596, 3
        %s1599 = smul.addr %s1598, 4
        %s1600 = scalar_lea.vmem %s4, %s1599
      $region64: #{deconv_bn_act.1} parent=59 // pred_fallthru
        _
    $region60: #{deconv_bn_act.1} parent=5 // pred_fallthru
      _
  $region6: #{deconv_bn_act.1} parent=0 // loop_footer
    %s14 = sadd.s32 1, %s10
  $region7: #{deconv_bn_act.1} parent=0 // loop_footer_branch
    %9 = sbr.rel target = $region3
  $region8: #{deconv_bn_act.1} parent=0 // loop_exit
    _

</llo_original>
